<compile_context>
chip_gen: v6e
topology: v6e:2x2x1
jax: 0.10.0
libtpu: 0.0.40
codegen_flags: <defaults>
</compile_context>

<pallas_src>
import jax
import jax.numpy as jnp
from jax import lax
from jax.experimental import pallas as pl
from jax.experimental.pallas import tpu as pltpu

# ---- sizes (small, consistent with the module's forward) ----
B = 2            # batch (must be > 1 due to BatchNorm1d in training mode)
C_IN = 3         # image channels (DEFAULT_AUG Normalize uses 3-channel stats)
IMG = 16         # image_size
HW = IMG * IMG
C_FEAT = 16      # backbone feature channels -> representation dim
PROJ = 32        # projection_size
HIDDEN = 64      # projection_hidden_size
BN_EPS = 1e-5
NORM_EPS = 1e-12

_V2 = 2          # two views, lane-packed


# -------------------- Pallas kernel --------------------
def _bn_relu(z, gamma, beta):
    # BatchNorm1d in training mode (biased batch variance) + ReLU.
    # The two views occupy disjoint lane ranges, so per-lane batch statistics
    # are automatically computed per view.
    mu = jnp.mean(z, axis=0, keepdims=True)
    mu2 = jnp.mean(z * z, axis=0, keepdims=True)
    var = mu2 - mu * mu
    zhat = (z - mu) * lax.rsqrt(var + BN_EPS)
    return jnp.maximum(zhat * gamma + beta, 0.0)


def _l2_normalize(x):
    # F.normalize(x, dim=-1, p=2): x / max(||x||_2, eps) == x * rsqrt(max(ss, eps^2))
    ss = jnp.sum(x * x, axis=-1, keepdims=True)
    return x * lax.rsqrt(jnp.maximum(ss, NORM_EPS * NORM_EPS))


def _per_sample_loss(x, y):
    xn = _l2_normalize(x)
    yn = _l2_normalize(y)
    return 2.0 - 2.0 * jnp.sum(xn * yn, axis=-1, keepdims=True)


def byol_kernel(p_ref, wc_ref, wm_ref, vec_ref, loss_ref):
    # packed per-feature vectors (each row duplicated for the two views)
    vecs = vec_ref[...]                               # (9, 2*HIDDEN)
    bc = vecs[0:1, :_V2 * C_FEAT]
    b1, g1, be1 = vecs[1:2, :], vecs[2:3, :], vecs[3:4, :]
    b2 = vecs[4:5, :_V2 * PROJ]
    b3, g3, be3 = vecs[5:6, :], vecs[6:7, :], vecs[7:8, :]
    b4 = vecs[8:9, :_V2 * PROJ]

    # packed block-diagonal MLP weights (static, sublane-aligned row offsets)
    r = 0
    w1 = wm_ref[r:r + _V2 * C_FEAT, :]
    r += _V2 * C_FEAT
    w2 = wm_ref[r:r + _V2 * HIDDEN, :_V2 * PROJ]
    r += _V2 * HIDDEN
    w3 = wm_ref[r:r + _V2 * PROJ, :]
    r += _V2 * PROJ
    w4 = wm_ref[r:r + _V2 * HIDDEN, :_V2 * PROJ]

    # --- backbone: 3x3 conv (im2col matmul) for BOTH views in one MXU pass.
    # Lanes [:C_FEAT] use the original weights (view 1); lanes [C_FEAT:] use
    # the dx-flipped weights (== horizontally flipped image; the global
    # average pool below is flip-invariant).
    h = jnp.dot(p_ref[...], wc_ref[...], preferred_element_type=jnp.float32) + bc
    h = jnp.maximum(h, 0.0)                           # (B*HW, 2*C_FEAT)

    # --- global average pool (replaces the dense pooling matmul) ---
    rep = jnp.mean(h.reshape(B, HW, _V2 * C_FEAT), axis=1)   # (B, 2*C_FEAT)

    # --- projector MLP: Linear -> BN -> ReLU -> Linear (both views lane-packed)
    z = jnp.dot(rep, w1, preferred_element_type=jnp.float32) + b1
    z = _bn_relu(z, g1, be1)
    proj = jnp.dot(z, w2, preferred_element_type=jnp.float32) + b2    # (B, 2*PROJ)

    # --- online predictor MLP ---
    z = jnp.dot(proj, w3, preferred_element_type=jnp.float32) + b3
    z = _bn_relu(z, g3, be3)
    pred = jnp.dot(z, w4, preferred_element_type=jnp.float32) + b4    # (B, 2*PROJ)

    # target encoder is a deepcopy of the online encoder at init -> identical
    # parameters, so target projections == online projections.
    pred1, pred2 = pred[:, :PROJ], pred[:, PROJ:]
    proj1, proj2 = proj[:, :PROJ], proj[:, PROJ:]
    per = _per_sample_loss(pred1, proj2) + _per_sample_loss(pred2, proj1)  # (B, 1)
    loss_ref[...] = jnp.mean(per)[None, None]


# -------------------- JAX glue --------------------
_MEAN = jnp.array([0.485, 0.456, 0.406], dtype=jnp.float32)
_STD = jnp.array([0.229, 0.224, 0.225], dtype=jnp.float32)


def _normalize(x_nhwc):
    return (x_nhwc - _MEAN) / _STD


def _im2col_3x3(x_nhwc):
    # same-padding 3x3 patches, ordering [dy, dx, cin] along the last axis.
    xp = jnp.pad(x_nhwc, ((0, 0), (1, 1), (1, 1), (0, 0)))
    cols = [xp[:, dy:dy + IMG, dx:dx + IMG, :] for dy in range(3) for dx in range(3)]
    patches = jnp.concatenate(cols, axis=-1)          # (B, H, W, 9*C_IN)
    return patches.reshape(B * HW, 9 * C_IN)


def _vmem_spec():
    return pl.BlockSpec(memory_space=pltpu.MemorySpace.VMEM)


def init_params(key):
    ks = jax.random.split(key, 8)
    f32 = jnp.float32
    return dict(
        # backbone conv: (3, 3, Cin, Cout)
        wc=jax.random.normal(ks[0], (3, 3, C_IN, C_FEAT), f32) * 0.1,
        bc=jax.random.normal(ks[1], (1, C_FEAT), f32) * 0.01,
        # projector MLP(dim=C_FEAT, proj=PROJ, hidden=HIDDEN)
        w1=jax.random.normal(ks[2], (C_FEAT, HIDDEN), f32) * 0.1,
        b1=jax.random.normal(ks[3], (1, HIDDEN), f32) * 0.01,
        g1=jnp.ones((1, HIDDEN), f32),
        be1=jnp.zeros((1, HIDDEN), f32),
        w2=jax.random.normal(ks[4], (HIDDEN, PROJ), f32) * 0.1,
        b2=jax.random.normal(ks[5], (1, PROJ), f32) * 0.01,
        # online predictor MLP(dim=PROJ, proj=PROJ, hidden=HIDDEN)
        w3=jax.random.normal(ks[6], (PROJ, HIDDEN), f32) * 0.1,
        b3=jnp.zeros((1, HIDDEN), f32),
        g3=jnp.ones((1, HIDDEN), f32),
        be3=jnp.zeros((1, HIDDEN), f32),
        w4=jax.random.normal(ks[7], (HIDDEN, PROJ), f32) * 0.1,
        b4=jnp.zeros((1, PROJ), f32),
    )


def _block_diag2(w):
    r, c = w.shape
    z = jnp.zeros((r, c), w.dtype)
    return jnp.concatenate(
        [jnp.concatenate([w, z], axis=1), jnp.concatenate([z, w], axis=1)], axis=0)


def pack_params(params):
    """Pack all parameters into 3 arrays (done once, outside the hot path)."""
    wc = params["wc"]                                       # (3, 3, C_IN, C_FEAT)
    wc_v1 = wc.reshape(9 * C_IN, C_FEAT)                    # view 1 (im2col order)
    wc_v2 = wc[:, ::-1, :, :].reshape(9 * C_IN, C_FEAT)     # dx-flipped -> view 2
    wconv = jnp.concatenate([wc_v1, wc_v2], axis=1)         # (27, 2*C_FEAT)

    def padc(w):  # pad columns to the common 2*HIDDEN width
        return jnp.pad(w, ((0, 0), (0, _V2 * HIDDEN - w.shape[1])))

    wmlp = jnp.concatenate(
        [padc(_block_diag2(params["w1"])),                  # ( 32, 128)
         padc(_block_diag2(params["w2"])),                  # (128,  64)->128
         padc(_block_diag2(params["w3"])),                  # ( 64, 128)
         padc(_block_diag2(params["w4"]))], axis=0)         # (352, 128)

    def dup(v):  # duplicate each (1, n) vector for the two lane-packed views
        return padc(jnp.concatenate([v, v], axis=1))

    vecs = jnp.concatenate(
        [dup(params["bc"]), dup(params["b1"]), dup(params["g1"]), dup(params["be1"]),
         dup(params["b2"]), dup(params["b3"]), dup(params["g3"]), dup(params["be3"]),
         dup(params["b4"])], axis=0)                        # (9, 128)
    return wconv, wmlp, vecs


@jax.jit
def byol_forward(x_nchw, wconv, wmlp, vecs):
    # TODO(synk): the stochastic augmentations (ColorJitter, RandomGrayscale,
    # GaussianBlur, RandomResizedCrop) have no deterministic Pallas equivalent;
    # view 1 applies Normalize only, view 2 applies a deterministic horizontal
    # flip + Normalize (realized as a dx-flipped conv weight inside the kernel).
    x_nhwc = jnp.transpose(x_nchw, (0, 2, 3, 1)).astype(jnp.float32)
    view1 = _normalize(x_nhwc)                 # single normalize pass
    p = _im2col_3x3(view1)                     # (B*HW, 9*C_IN), shared by both views

    flops = (2 * (B * HW) * (9 * C_IN) * (_V2 * C_FEAT)
             + 2 * B * (_V2 * C_FEAT * _V2 * HIDDEN + _V2 * HIDDEN * _V2 * PROJ
                        + _V2 * PROJ * _V2 * HIDDEN + _V2 * HIDDEN * _V2 * PROJ))
    transcendentals = 2 * _V2 * HIDDEN + 4 * B      # BN rsqrt + L2-norm rsqrt
    bytes_accessed = 4 * (p.size + wconv.size + wmlp.size + vecs.size + 1)

    loss = pl.pallas_call(
        byol_kernel,
        out_shape=jax.ShapeDtypeStruct((1, 1), jnp.float32),
        in_specs=[_vmem_spec(), _vmem_spec(), _vmem_spec(), _vmem_spec()],
        out_specs=_vmem_spec(),
        cost_estimate=pl.CostEstimate(flops=flops,
                                      transcendentals=transcendentals,
                                      bytes_accessed=bytes_accessed),
    )(p, wconv, wmlp, vecs)
    return loss[0, 0]


if __name__ == "__main__":
    key = jax.random.PRNGKey(0)
    k_x, k_p = jax.random.split(key)
    x = jax.random.normal(k_x, (B, C_IN, IMG, IMG), jnp.float32)  # NCHW like PyTorch
    params = init_params(k_p)
    wconv, wmlp, vecs = pack_params(params)   # packed once (4 kernel operands total)

    loss = byol_forward(x, wconv, wmlp, vecs)
    jax.block_until_ready(loss)
    assert loss.shape == () and jnp.isfinite(loss)
    print("KERNEL_OK")
</pallas_src>

<mosaic_0001>
module attributes {stable_mosaic.version = 11 : i64} {
  func.func @byol_kernel(%arg0: memref<512x27xf32, #tpu.memory_space<vmem>>, %arg1: memref<27x32xf32, #tpu.memory_space<vmem>>, %arg2: memref<352x128xf32, #tpu.memory_space<vmem>>, %arg3: memref<9x128xf32, #tpu.memory_space<vmem>>, %arg4: memref<1x1xf32, #tpu.memory_space<vmem>>) attributes {dimension_semantics = [], scalar_prefetch = 0 : i64, scratch_operands = 0 : i64, tpu.core_type = #tpu.core_type<tc>} {
    %c0 = arith.constant 0 : index
    %c0_0 = arith.constant 0 : index
    %0 = vector.load %arg3[%c0, %c0_0] : memref<9x128xf32, #tpu.memory_space<vmem>>, vector<9x128xf32>
    %1 = vector.extract_strided_slice %0 {offsets = [0, 0], sizes = [1, 32], strides = [1, 1]} : vector<9x128xf32> to vector<1x32xf32>
    %2 = vector.extract_strided_slice %0 {offsets = [1, 0], sizes = [1, 128], strides = [1, 1]} : vector<9x128xf32> to vector<1x128xf32>
    %3 = vector.extract_strided_slice %0 {offsets = [2, 0], sizes = [1, 128], strides = [1, 1]} : vector<9x128xf32> to vector<1x128xf32>
    %4 = vector.extract_strided_slice %0 {offsets = [3, 0], sizes = [1, 128], strides = [1, 1]} : vector<9x128xf32> to vector<1x128xf32>
    %5 = vector.extract_strided_slice %0 {offsets = [4, 0], sizes = [1, 64], strides = [1, 1]} : vector<9x128xf32> to vector<1x64xf32>
    %6 = vector.extract_strided_slice %0 {offsets = [5, 0], sizes = [1, 128], strides = [1, 1]} : vector<9x128xf32> to vector<1x128xf32>
    %7 = vector.extract_strided_slice %0 {offsets = [6, 0], sizes = [1, 128], strides = [1, 1]} : vector<9x128xf32> to vector<1x128xf32>
    %8 = vector.extract_strided_slice %0 {offsets = [7, 0], sizes = [1, 128], strides = [1, 1]} : vector<9x128xf32> to vector<1x128xf32>
    %9 = vector.extract_strided_slice %0 {offsets = [8, 0], sizes = [1, 64], strides = [1, 1]} : vector<9x128xf32> to vector<1x64xf32>
    %c0_1 = arith.constant 0 : index
    %c0_2 = arith.constant 0 : index
    %10 = vector.load %arg2[%c0_1, %c0_2] : memref<352x128xf32, #tpu.memory_space<vmem>>, vector<32x128xf32>
    %c32 = arith.constant 32 : index
    %c0_3 = arith.constant 0 : index
    %11 = vector.load %arg2[%c32, %c0_3] : memref<352x128xf32, #tpu.memory_space<vmem>>, vector<128x64xf32>
    %c160 = arith.constant 160 : index
    %c0_4 = arith.constant 0 : index
    %12 = vector.load %arg2[%c160, %c0_4] : memref<352x128xf32, #tpu.memory_space<vmem>>, vector<64x128xf32>
    %c224 = arith.constant 224 : index
    %c0_5 = arith.constant 0 : index
    %13 = vector.load %arg2[%c224, %c0_5] : memref<352x128xf32, #tpu.memory_space<vmem>>, vector<128x64xf32>
    %c0_6 = arith.constant 0 : index
    %c0_7 = arith.constant 0 : index
    %14 = vector.load %arg0[%c0_6, %c0_7] : memref<512x27xf32, #tpu.memory_space<vmem>>, vector<512x27xf32>
    %c0_8 = arith.constant 0 : index
    %c0_9 = arith.constant 0 : index
    %15 = vector.load %arg1[%c0_8, %c0_9] : memref<27x32xf32, #tpu.memory_space<vmem>>, vector<27x32xf32>
    %cst = arith.constant dense<0.000000e+00> : vector<512x32xf32>
    %16 = tpu.matmul %14, %15, %cst {dimension_numbers = #tpu.dot_dimension_numbers<[1], [0], [0], [1], [0, 0, 1, 1], [], []>} : vector<512x27xf32>, vector<27x32xf32>, vector<512x32xf32> -> vector<512x32xf32>
    %17 = vector.broadcast %1 : vector<1x32xf32> to vector<512x32xf32>
    %18 = arith.addf %16, %17 : vector<512x32xf32>
    %cst_10 = arith.constant 0.000000e+00 : f32
    %19 = vector.broadcast %cst_10 : f32 to vector<512x32xf32>
    %20 = arith.maximumf %18, %19 : vector<512x32xf32>
    %21 = vector.shape_cast %20 : vector<512x32xf32> to vector<2x256x32xf32>
    %cst_11 = arith.constant dense<0.000000e+00> : vector<2x32xf32>
    %22 = vector.multi_reduction <add>, %21, %cst_11 [1] : vector<2x256x32xf32> to vector<2x32xf32>
    %cst_12 = arith.constant 2.560000e+02 : f32
    %23 = vector.broadcast %cst_12 : f32 to vector<2x32xf32>
    %24 = arith.divf %22, %23 : vector<2x32xf32>
    %cst_13 = arith.constant dense<0.000000e+00> : vector<2x128xf32>
    %25 = tpu.matmul %24, %10, %cst_13 {dimension_numbers = #tpu.dot_dimension_numbers<[1], [0], [0], [1], [0, 0, 1, 1], [], []>} : vector<2x32xf32>, vector<32x128xf32>, vector<2x128xf32> -> vector<2x128xf32>
    %26 = vector.broadcast %2 : vector<1x128xf32> to vector<2x128xf32>
    %27 = arith.addf %25, %26 : vector<2x128xf32>
    %cst_14 = arith.constant dense<0.000000e+00> : vector<128xf32>
    %28 = vector.multi_reduction <add>, %27, %cst_14 [0] : vector<2x128xf32> to vector<128xf32>
    %29 = vector.shape_cast %28 : vector<128xf32> to vector<1x128xf32>
    %cst_15 = arith.constant 2.000000e+00 : f32
    %30 = vector.broadcast %cst_15 : f32 to vector<1x128xf32>
    %31 = arith.divf %29, %30 : vector<1x128xf32>
    %32 = arith.mulf %27, %27 : vector<2x128xf32>
    %cst_16 = arith.constant dense<0.000000e+00> : vector<128xf32>
    %33 = vector.multi_reduction <add>, %32, %cst_16 [0] : vector<2x128xf32> to vector<128xf32>
    %34 = vector.shape_cast %33 : vector<128xf32> to vector<1x128xf32>
    %cst_17 = arith.constant 2.000000e+00 : f32
    %35 = vector.broadcast %cst_17 : f32 to vector<1x128xf32>
    %36 = arith.divf %34, %35 : vector<1x128xf32>
    %37 = arith.mulf %31, %31 : vector<1x128xf32>
    %38 = arith.subf %36, %37 : vector<1x128xf32>
    %39 = vector.broadcast %31 : vector<1x128xf32> to vector<2x128xf32>
    %40 = arith.subf %27, %39 : vector<2x128xf32>
    %cst_18 = arith.constant 9.99999974E-6 : f32
    %41 = vector.broadcast %cst_18 : f32 to vector<1x128xf32>
    %42 = arith.addf %38, %41 : vector<1x128xf32>
    %43 = math.rsqrt %42 : vector<1x128xf32>
    %44 = vector.broadcast %43 : vector<1x128xf32> to vector<2x128xf32>
    %45 = arith.mulf %40, %44 : vector<2x128xf32>
    %46 = vector.broadcast %3 : vector<1x128xf32> to vector<2x128xf32>
    %47 = arith.mulf %45, %46 : vector<2x128xf32>
    %48 = vector.broadcast %4 : vector<1x128xf32> to vector<2x128xf32>
    %49 = arith.addf %47, %48 : vector<2x128xf32>
    %cst_19 = arith.constant 0.000000e+00 : f32
    %50 = vector.broadcast %cst_19 : f32 to vector<2x128xf32>
    %51 = arith.maximumf %49, %50 : vector<2x128xf32>
    %cst_20 = arith.constant dense<0.000000e+00> : vector<2x64xf32>
    %52 = tpu.matmul %51, %11, %cst_20 {dimension_numbers = #tpu.dot_dimension_numbers<[1], [0], [0], [1], [0, 0, 1, 1], [], []>} : vector<2x128xf32>, vector<128x64xf32>, vector<2x64xf32> -> vector<2x64xf32>
    %53 = vector.broadcast %5 : vector<1x64xf32> to vector<2x64xf32>
    %54 = arith.addf %52, %53 : vector<2x64xf32>
    %cst_21 = arith.constant dense<0.000000e+00> : vector<2x128xf32>
    %55 = tpu.matmul %54, %12, %cst_21 {dimension_numbers = #tpu.dot_dimension_numbers<[1], [0], [0], [1], [0, 0, 1, 1], [], []>} : vector<2x64xf32>, vector<64x128xf32>, vector<2x128xf32> -> vector<2x128xf32>
    %56 = vector.broadcast %6 : vector<1x128xf32> to vector<2x128xf32>
    %57 = arith.addf %55, %56 : vector<2x128xf32>
    %cst_22 = arith.constant dense<0.000000e+00> : vector<128xf32>
    %58 = vector.multi_reduction <add>, %57, %cst_22 [0] : vector<2x128xf32> to vector<128xf32>
    %59 = vector.shape_cast %58 : vector<128xf32> to vector<1x128xf32>
    %cst_23 = arith.constant 2.000000e+00 : f32
    %60 = vector.broadcast %cst_23 : f32 to vector<1x128xf32>
    %61 = arith.divf %59, %60 : vector<1x128xf32>
    %62 = arith.mulf %57, %57 : vector<2x128xf32>
    %cst_24 = arith.constant dense<0.000000e+00> : vector<128xf32>
    %63 = vector.multi_reduction <add>, %62, %cst_24 [0] : vector<2x128xf32> to vector<128xf32>
    %64 = vector.shape_cast %63 : vector<128xf32> to vector<1x128xf32>
    %cst_25 = arith.constant 2.000000e+00 : f32
    %65 = vector.broadcast %cst_25 : f32 to vector<1x128xf32>
    %66 = arith.divf %64, %65 : vector<1x128xf32>
    %67 = arith.mulf %61, %61 : vector<1x128xf32>
    %68 = arith.subf %66, %67 : vector<1x128xf32>
    %69 = vector.broadcast %61 : vector<1x128xf32> to vector<2x128xf32>
    %70 = arith.subf %57, %69 : vector<2x128xf32>
    %cst_26 = arith.constant 9.99999974E-6 : f32
    %71 = vector.broadcast %cst_26 : f32 to vector<1x128xf32>
    %72 = arith.addf %68, %71 : vector<1x128xf32>
    %73 = math.rsqrt %72 : vector<1x128xf32>
    %74 = vector.broadcast %73 : vector<1x128xf32> to vector<2x128xf32>
    %75 = arith.mulf %70, %74 : vector<2x128xf32>
    %76 = vector.broadcast %7 : vector<1x128xf32> to vector<2x128xf32>
    %77 = arith.mulf %75, %76 : vector<2x128xf32>
    %78 = vector.broadcast %8 : vector<1x128xf32> to vector<2x128xf32>
    %79 = arith.addf %77, %78 : vector<2x128xf32>
    %cst_27 = arith.constant 0.000000e+00 : f32
    %80 = vector.broadcast %cst_27 : f32 to vector<2x128xf32>
    %81 = arith.maximumf %79, %80 : vector<2x128xf32>
    %cst_28 = arith.constant dense<0.000000e+00> : vector<2x64xf32>
    %82 = tpu.matmul %81, %13, %cst_28 {dimension_numbers = #tpu.dot_dimension_numbers<[1], [0], [0], [1], [0, 0, 1, 1], [], []>} : vector<2x128xf32>, vector<128x64xf32>, vector<2x64xf32> -> vector<2x64xf32>
    %83 = vector.broadcast %9 : vector<1x64xf32> to vector<2x64xf32>
    %84 = arith.addf %82, %83 : vector<2x64xf32>
    %85 = vector.extract_strided_slice %84 {offsets = [0, 0], sizes = [2, 32], strides = [1, 1]} : vector<2x64xf32> to vector<2x32xf32>
    %86 = vector.extract_strided_slice %84 {offsets = [0, 32], sizes = [2, 32], strides = [1, 1]} : vector<2x64xf32> to vector<2x32xf32>
    %87 = vector.extract_strided_slice %54 {offsets = [0, 0], sizes = [2, 32], strides = [1, 1]} : vector<2x64xf32> to vector<2x32xf32>
    %88 = vector.extract_strided_slice %54 {offsets = [0, 32], sizes = [2, 32], strides = [1, 1]} : vector<2x64xf32> to vector<2x32xf32>
    %89 = arith.mulf %85, %85 : vector<2x32xf32>
    %cst_29 = arith.constant dense<0.000000e+00> : vector<2xf32>
    %90 = vector.multi_reduction <add>, %89, %cst_29 [1] : vector<2x32xf32> to vector<2xf32>
    %91 = vector.shape_cast %90 : vector<2xf32> to vector<2x1xf32>
    %cst_30 = arith.constant 1.000000e-24 : f32
    %92 = vector.broadcast %cst_30 : f32 to vector<2x1xf32>
    %93 = arith.maximumf %91, %92 : vector<2x1xf32>
    %94 = math.rsqrt %93 : vector<2x1xf32>
    %95 = vector.broadcast %94 : vector<2x1xf32> to vector<2x32xf32>
    %96 = arith.mulf %85, %95 : vector<2x32xf32>
    %97 = arith.mulf %88, %88 : vector<2x32xf32>
    %cst_31 = arith.constant dense<0.000000e+00> : vector<2xf32>
    %98 = vector.multi_reduction <add>, %97, %cst_31 [1] : vector<2x32xf32> to vector<2xf32>
    %99 = vector.shape_cast %98 : vector<2xf32> to vector<2x1xf32>
    %cst_32 = arith.constant 1.000000e-24 : f32
    %100 = vector.broadcast %cst_32 : f32 to vector<2x1xf32>
    %101 = arith.maximumf %99, %100 : vector<2x1xf32>
    %102 = math.rsqrt %101 : vector<2x1xf32>
    %103 = vector.broadcast %102 : vector<2x1xf32> to vector<2x32xf32>
    %104 = arith.mulf %88, %103 : vector<2x32xf32>
    %105 = arith.mulf %96, %104 : vector<2x32xf32>
    %cst_33 = arith.constant dense<0.000000e+00> : vector<2xf32>
    %106 = vector.multi_reduction <add>, %105, %cst_33 [1] : vector<2x32xf32> to vector<2xf32>
    %107 = vector.shape_cast %106 : vector<2xf32> to vector<2x1xf32>
    %cst_34 = arith.constant 2.000000e+00 : f32
    %108 = vector.broadcast %cst_34 : f32 to vector<2x1xf32>
    %109 = arith.mulf %108, %107 : vector<2x1xf32>
    %cst_35 = arith.constant 2.000000e+00 : f32
    %110 = vector.broadcast %cst_35 : f32 to vector<2x1xf32>
    %111 = arith.subf %110, %109 : vector<2x1xf32>
    %112 = arith.mulf %86, %86 : vector<2x32xf32>
    %cst_36 = arith.constant dense<0.000000e+00> : vector<2xf32>
    %113 = vector.multi_reduction <add>, %112, %cst_36 [1] : vector<2x32xf32> to vector<2xf32>
    %114 = vector.shape_cast %113 : vector<2xf32> to vector<2x1xf32>
    %cst_37 = arith.constant 1.000000e-24 : f32
    %115 = vector.broadcast %cst_37 : f32 to vector<2x1xf32>
    %116 = arith.maximumf %114, %115 : vector<2x1xf32>
    %117 = math.rsqrt %116 : vector<2x1xf32>
    %118 = vector.broadcast %117 : vector<2x1xf32> to vector<2x32xf32>
    %119 = arith.mulf %86, %118 : vector<2x32xf32>
    %120 = arith.mulf %87, %87 : vector<2x32xf32>
    %cst_38 = arith.constant dense<0.000000e+00> : vector<2xf32>
    %121 = vector.multi_reduction <add>, %120, %cst_38 [1] : vector<2x32xf32> to vector<2xf32>
    %122 = vector.shape_cast %121 : vector<2xf32> to vector<2x1xf32>
    %cst_39 = arith.constant 1.000000e-24 : f32
    %123 = vector.broadcast %cst_39 : f32 to vector<2x1xf32>
    %124 = arith.maximumf %122, %123 : vector<2x1xf32>
    %125 = math.rsqrt %124 : vector<2x1xf32>
    %126 = vector.broadcast %125 : vector<2x1xf32> to vector<2x32xf32>
    %127 = arith.mulf %87, %126 : vector<2x32xf32>
    %128 = arith.mulf %119, %127 : vector<2x32xf32>
    %cst_40 = arith.constant dense<0.000000e+00> : vector<2xf32>
    %129 = vector.multi_reduction <add>, %128, %cst_40 [1] : vector<2x32xf32> to vector<2xf32>
    %130 = vector.shape_cast %129 : vector<2xf32> to vector<2x1xf32>
    %cst_41 = arith.constant 2.000000e+00 : f32
    %131 = vector.broadcast %cst_41 : f32 to vector<2x1xf32>
    %132 = arith.mulf %131, %130 : vector<2x1xf32>
    %cst_42 = arith.constant 2.000000e+00 : f32
    %133 = vector.broadcast %cst_42 : f32 to vector<2x1xf32>
    %134 = arith.subf %133, %132 : vector<2x1xf32>
    %135 = arith.addf %111, %134 : vector<2x1xf32>
    %136 = vector.shape_cast %135 : vector<2x1xf32> to vector<1x2x1xf32>
    %cst_43 = arith.constant dense<0.000000e+00> : vector<1xf32>
    %137 = vector.multi_reduction <add>, %136, %cst_43 [1, 2] : vector<1x2x1xf32> to vector<1xf32>
    %138 = vector.shape_cast %137 : vector<1xf32> to vector<1x1x1xf32>
    %139 = vector.extract %138[0, 0, 0] : f32 from vector<1x1x1xf32>
    %cst_44 = arith.constant 2.000000e+00 : f32
    %140 = arith.divf %139, %cst_44 : f32
    %141 = vector.broadcast %140 : f32 to vector<1x1xf32>
    %c0_45 = arith.constant 0 : index
    %c0_46 = arith.constant 0 : index
    %142 = vector.load %arg4[%c0_45, %c0_46] : memref<1x1xf32, #tpu.memory_space<vmem>>, vector<1x1xf32>
    tpu.vector_store %arg4[%c0_45, %c0_46], %141 {strides = array<i32>} : memref<1x1xf32, #tpu.memory_space<vmem>>, vector<1x1xf32>,
    return
  }
}

</mosaic_0001>

<llo_original>
// kernel: byol_forward.1
$region0: #{byol_forward.1}
  #allocation0 [shape = 'u32[]', space=smem, size = 0x4, offset = 0x4, fixed_abs, tag = 'smem constant byte address 0x4 - core index']
  #allocation1 [shape = 'u32[144,128]{1,0:T(1,128)}', space=vmem, size = 0x12000, scoped, tag = 'internal scratch']
  %s0 = inlined_call_operand.vmem [shape: f32[512,27], index: 0, kind: input, shape index: {}]
  %s1 = inlined_call_operand.vmem [shape: f32[27,32], index: 1, kind: input, shape index: {}]
  %s2 = inlined_call_operand.vmem [shape: f32[352,128], index: 2, kind: input, shape index: {}]
  %s3 = inlined_call_operand.vmem [shape: f32[9,128], index: 3, kind: input, shape index: {}]
  %s4 = inlined_call_operand.hbm [shape: f32[1,1], index: 4, kind: output, shape index: {}]
  %s5 = sld [smem:[#allocation0]]
  $region26: #{byol_forward.1} parent=0
    _
  %s7 = ssub.s32 1, %s5
  %s8 = scalar_select 0, %s7, %s5
  $region1: #{byol_forward.1} parent=0
    #allocation2 [shape = 'u8[512]{0}', space=vmem, size = 0x400, scoped, tag = 'output window, operand 0, single buffered']
    #allocation3 [shape = 's32[1]{0}', space=sflag, size = 0x4, scoped, tag = 'scoped memory for byol_forward.1']
    %9 = vsyncpa [#allocation3], 0
    // Predicated region
    $region2: #{byol_forward.1} parent=1 // pred_check
      _
    $region3: #{byol_forward.1} parent=1 // pred_check_branch
      %11 = sbr.rel (0) target = $region5
    $region4: #{byol_forward.1} parent=1 // pred_region
      _
    $region5: #{byol_forward.1} parent=1 // pred_fallthru
      _
    // Predicated region
    $region6: #{byol_forward.1} parent=1 // pred_check
      _
    $region7: #{byol_forward.1} parent=1 // pred_check_branch
      %13 = sbr.rel (0) target = $region9
    $region8: #{byol_forward.1} parent=1 // pred_region
      _
    $region9: #{byol_forward.1} parent=1 // pred_fallthru
      _
    // Predicated region
    $region10: #{byol_forward.1} parent=1 // pred_check
      _
    $region11: #{byol_forward.1} parent=1 // pred_check_branch
      %15 = sbr.rel (0) target = $region13
    $region12: #{byol_forward.1} parent=1 // pred_region
      _
    $region13: #{byol_forward.1} parent=1 // pred_fallthru
      _
    // Predicated region
    $region14: #{byol_forward.1} parent=1 // pred_check
      _
    $region15: #{byol_forward.1} parent=1 // pred_check_branch
      %17 = sbr.rel (0) target = $region17
    $region16: #{byol_forward.1} parent=1 // pred_region
      _
    $region17: #{byol_forward.1} parent=1 // pred_fallthru
      _
    %v18 = vld [vmem:[%s3] sm:$0xff]
    %v19 = vld [vmem:[%s3 + $0x8] sm:$0x1]
    %v20 = vld [vmem:[%s2] sm:$0xff]
    %v21 = vld [vmem:[%s2 + $0x8] sm:$0xff]
    %v22 = vld [vmem:[%s2 + $0x10] sm:$0xff]
    %v23 = vld [vmem:[%s2 + $0x18] sm:$0xff]
    %v24 = vld [vmem:[%s2 + $0x20] sm:$0xff]
    %v25 = vld [vmem:[%s2 + $0x28] sm:$0xff]
    %v26 = vld [vmem:[%s2 + $0x30] sm:$0xff]
    %v27 = vld [vmem:[%s2 + $0x38] sm:$0xff]
    %v28 = vld [vmem:[%s2 + $0x40] sm:$0xff]
    %v29 = vld [vmem:[%s2 + $0x48] sm:$0xff]
    %v30 = vld [vmem:[%s2 + $0x50] sm:$0xff]
    %v31 = vld [vmem:[%s2 + $0x58] sm:$0xff]
    %v32 = vld [vmem:[%s2 + $0x60] sm:$0xff]
    %v33 = vld [vmem:[%s2 + $0x68] sm:$0xff]
    %v34 = vld [vmem:[%s2 + $0x70] sm:$0xff]
    %v35 = vld [vmem:[%s2 + $0x78] sm:$0xff]
    %v36 = vld [vmem:[%s2 + $0x80] sm:$0xff]
    %v37 = vld [vmem:[%s2 + $0x88] sm:$0xff]
    %v38 = vld [vmem:[%s2 + $0x90] sm:$0xff]
    %v39 = vld [vmem:[%s2 + $0x98] sm:$0xff]
    %v40 = vld [vmem:[%s2 + $0xa0] sm:$0xff]
    %v41 = vld [vmem:[%s2 + $0xa8] sm:$0xff]
    %v42 = vld [vmem:[%s2 + $0xb0] sm:$0xff]
    %v43 = vld [vmem:[%s2 + $0xb8] sm:$0xff]
    %v44 = vld [vmem:[%s2 + $0xc0] sm:$0xff]
    %v45 = vld [vmem:[%s2 + $0xc8] sm:$0xff]
    %v46 = vld [vmem:[%s2 + $0xd0] sm:$0xff]
    %v47 = vld [vmem:[%s2 + $0xd8] sm:$0xff]
    %v48 = vld [vmem:[%s2 + $0xe0] sm:$0xff]
    %v49 = vld [vmem:[%s2 + $0xe8] sm:$0xff]
    %v50 = vld [vmem:[%s2 + $0xf0] sm:$0xff]
    %v51 = vld [vmem:[%s2 + $0xf8] sm:$0xff]
    %v52 = vld [vmem:[%s2 + $0x100] sm:$0xff]
    %v53 = vld [vmem:[%s2 + $0x108] sm:$0xff]
    %v54 = vld [vmem:[%s2 + $0x110] sm:$0xff]
    %v55 = vld [vmem:[%s2 + $0x118] sm:$0xff]
    %v56 = vld [vmem:[%s2 + $0x120] sm:$0xff]
    %v57 = vld [vmem:[%s2 + $0x128] sm:$0xff]
    %v58 = vld [vmem:[%s2 + $0x130] sm:$0xff]
    %v59 = vld [vmem:[%s2 + $0x138] sm:$0xff]
    %v60 = vld [vmem:[%s2 + $0x140] sm:$0xff]
    %v61 = vld [vmem:[%s2 + $0x148] sm:$0xff]
    %v62 = vld [vmem:[%s2 + $0x150] sm:$0xff]
    %v63 = vld [vmem:[%s2 + $0x158] sm:$0xff]
    %v64 = vld [vmem:[%s0] sm:$0xff]
    %v65 = vld [vmem:[%s0 + $0x8] sm:$0xff]
    %v66 = vld [vmem:[%s0 + $0x10] sm:$0xff]
    %v67 = vld [vmem:[%s0 + $0x18] sm:$0xff]
    %v68 = vld [vmem:[%s0 + $0x20] sm:$0xff]
    %v69 = vld [vmem:[%s0 + $0x28] sm:$0xff]
    %v70 = vld [vmem:[%s0 + $0x30] sm:$0xff]
    %v71 = vld [vmem:[%s0 + $0x38] sm:$0xff]
    %v72 = vld [vmem:[%s0 + $0x40] sm:$0xff]
    %v73 = vld [vmem:[%s0 + $0x48] sm:$0xff]
    %v74 = vld [vmem:[%s0 + $0x50] sm:$0xff]
    %v75 = vld [vmem:[%s0 + $0x58] sm:$0xff]
    %v76 = vld [vmem:[%s0 + $0x60] sm:$0xff]
    %v77 = vld [vmem:[%s0 + $0x68] sm:$0xff]
    %v78 = vld [vmem:[%s0 + $0x70] sm:$0xff]
    %v79 = vld [vmem:[%s0 + $0x78] sm:$0xff]
    %v80 = vld [vmem:[%s0 + $0x80] sm:$0xff]
    %v81 = vld [vmem:[%s0 + $0x88] sm:$0xff]
    %v82 = vld [vmem:[%s0 + $0x90] sm:$0xff]
    %v83 = vld [vmem:[%s0 + $0x98] sm:$0xff]
    %v84 = vld [vmem:[%s0 + $0xa0] sm:$0xff]
    %v85 = vld [vmem:[%s0 + $0xa8] sm:$0xff]
    %v86 = vld [vmem:[%s0 + $0xb0] sm:$0xff]
    %v87 = vld [vmem:[%s0 + $0xb8] sm:$0xff]
    %v88 = vld [vmem:[%s0 + $0xc0] sm:$0xff]
    %v89 = vld [vmem:[%s0 + $0xc8] sm:$0xff]
    %v90 = vld [vmem:[%s0 + $0xd0] sm:$0xff]
    %v91 = vld [vmem:[%s0 + $0xd8] sm:$0xff]
    %v92 = vld [vmem:[%s0 + $0xe0] sm:$0xff]
    %v93 = vld [vmem:[%s0 + $0xe8] sm:$0xff]
    %v94 = vld [vmem:[%s0 + $0xf0] sm:$0xff]
    %v95 = vld [vmem:[%s0 + $0xf8] sm:$0xff]
    %v96 = vld [vmem:[%s0 + $0x100] sm:$0xff]
    %v97 = vld [vmem:[%s0 + $0x108] sm:$0xff]
    %v98 = vld [vmem:[%s0 + $0x110] sm:$0xff]
    %v99 = vld [vmem:[%s0 + $0x118] sm:$0xff]
    %v100 = vld [vmem:[%s0 + $0x120] sm:$0xff]
    %v101 = vld [vmem:[%s0 + $0x128] sm:$0xff]
    %v102 = vld [vmem:[%s0 + $0x130] sm:$0xff]
    %v103 = vld [vmem:[%s0 + $0x138] sm:$0xff]
    %v104 = vld [vmem:[%s0 + $0x140] sm:$0xff]
    %v105 = vld [vmem:[%s0 + $0x148] sm:$0xff]
    %v106 = vld [vmem:[%s0 + $0x150] sm:$0xff]
    %v107 = vld [vmem:[%s0 + $0x158] sm:$0xff]
    %v108 = vld [vmem:[%s0 + $0x160] sm:$0xff]
    %v109 = vld [vmem:[%s0 + $0x168] sm:$0xff]
    %v110 = vld [vmem:[%s0 + $0x170] sm:$0xff]
    %v111 = vld [vmem:[%s0 + $0x178] sm:$0xff]
    %v112 = vld [vmem:[%s0 + $0x180] sm:$0xff]
    %v113 = vld [vmem:[%s0 + $0x188] sm:$0xff]
    %v114 = vld [vmem:[%s0 + $0x190] sm:$0xff]
    %v115 = vld [vmem:[%s0 + $0x198] sm:$0xff]
    %v116 = vld [vmem:[%s0 + $0x1a0] sm:$0xff]
    %v117 = vld [vmem:[%s0 + $0x1a8] sm:$0xff]
    %v118 = vld [vmem:[%s0 + $0x1b0] sm:$0xff]
    %v119 = vld [vmem:[%s0 + $0x1b8] sm:$0xff]
    %v120 = vld [vmem:[%s0 + $0x1c0] sm:$0xff]
    %v121 = vld [vmem:[%s0 + $0x1c8] sm:$0xff]
    %v122 = vld [vmem:[%s0 + $0x1d0] sm:$0xff]
    %v123 = vld [vmem:[%s0 + $0x1d8] sm:$0xff]
    %v124 = vld [vmem:[%s0 + $0x1e0] sm:$0xff]
    %v125 = vld [vmem:[%s0 + $0x1e8] sm:$0xff]
    %v126 = vld [vmem:[%s0 + $0x1f0] sm:$0xff]
    %v127 = vld [vmem:[%s0 + $0x1f8] sm:$0xff]
    %v128 = vld [vmem:[%s1] sm:$0xff]
    %v129 = vld [vmem:[%s1 + $0x8] sm:$0xff]
    %v130 = vld [vmem:[%s1 + $0x10] sm:$0xff]
    %v131 = vld [vmem:[%s1 + $0x18] sm:$0x7]
    %v132 = vlaneseq
    %v133 = vshrl.u32 %v132, 7
    %v134 = vsub.s32 0, %v133
    %v135 = vrot.slane %v18, %v134
    %vm136 = vcmask 220160
    %v138 = vsel %vm136, %v64, 0
    %v141 = vsel %vm136, %v65, 0
    %v144 = vsel %vm136, %v66, 0
    %v147 = vsel %vm136, %v67, 0
    %v150 = vsel %vm136, %v68, 0
    %v153 = vsel %vm136, %v69, 0
    %v156 = vsel %vm136, %v70, 0
    %v159 = vsel %vm136, %v71, 0
    %v162 = vsel %vm136, %v72, 0
    %v165 = vsel %vm136, %v73, 0
    %v168 = vsel %vm136, %v74, 0
    %v171 = vsel %vm136, %v75, 0
    %v174 = vsel %vm136, %v76, 0
    %v177 = vsel %vm136, %v77, 0
    %v180 = vsel %vm136, %v78, 0
    %v183 = vsel %vm136, %v79, 0
    %v186 = vsel %vm136, %v80, 0
    %v189 = vsel %vm136, %v81, 0
    %v192 = vsel %vm136, %v82, 0
    %v195 = vsel %vm136, %v83, 0
    %v198 = vsel %vm136, %v84, 0
    %v201 = vsel %vm136, %v85, 0
    %v204 = vsel %vm136, %v86, 0
    %v207 = vsel %vm136, %v87, 0
    %v210 = vsel %vm136, %v88, 0
    %v213 = vsel %vm136, %v89, 0
    %v216 = vsel %vm136, %v90, 0
    %v219 = vsel %vm136, %v91, 0
    %v222 = vsel %vm136, %v92, 0
    %v225 = vsel %vm136, %v93, 0
    %v228 = vsel %vm136, %v94, 0
    %v231 = vsel %vm136, %v95, 0
    %v234 = vsel %vm136, %v96, 0
    %v237 = vsel %vm136, %v97, 0
    %v240 = vsel %vm136, %v98, 0
    %v243 = vsel %vm136, %v99, 0
    %v246 = vsel %vm136, %v100, 0
    %v249 = vsel %vm136, %v101, 0
    %v252 = vsel %vm136, %v102, 0
    %v255 = vsel %vm136, %v103, 0
    %v258 = vsel %vm136, %v104, 0
    %v261 = vsel %vm136, %v105, 0
    %v264 = vsel %vm136, %v106, 0
    %v267 = vsel %vm136, %v107, 0
    %v270 = vsel %vm136, %v108, 0
    %v273 = vsel %vm136, %v109, 0
    %v276 = vsel %vm136, %v110, 0
    %v279 = vsel %vm136, %v111, 0
    %v282 = vsel %vm136, %v112, 0
    %v285 = vsel %vm136, %v113, 0
    %v288 = vsel %vm136, %v114, 0
    %v291 = vsel %vm136, %v115, 0
    %v294 = vsel %vm136, %v116, 0
    %v297 = vsel %vm136, %v117, 0
    %v300 = vsel %vm136, %v118, 0
    %v303 = vsel %vm136, %v119, 0
    %v306 = vsel %vm136, %v120, 0
    %v309 = vsel %vm136, %v121, 0
    %v312 = vsel %vm136, %v122, 0
    %v315 = vsel %vm136, %v123, 0
    %v318 = vsel %vm136, %v124, 0
    %v321 = vsel %vm136, %v125, 0
    %v324 = vsel %vm136, %v126, 0
    %v327 = vsel %vm136, %v127, 0
    %vm329 = vcmask 1042432
    %v331 = vsel %vm329, %v131, 0
    %333 = vmatprep.subr.mxu0 0.0
    %334 = vmatpush1.msra.mxu0 0.0
    %335 = vmatprep.subr.mxu0 0.0
    %336 = vmatpush1.msra.mxu0 0.0
    %337 = vmatprep.subr.mxu0 0.0
    %338 = vmatpush1.msra.mxu0 0.0
    %339 = vmatprep.subr.mxu0 0.0
    %340 = vmatpush1.msra.mxu0 0.0
    %341 = vmatprep.subr.mxu0 0.0
    %342 = vmatpush1.msra.mxu0 0.0
    %343 = vmatprep.subr.mxu0 0.0
    %344 = vmatpush1.msra.mxu0 0.0
    %345 = vmatprep.subr.mxu0 0.0
    %346 = vmatpush1.msra.mxu0 0.0
    %347 = vmatprep.subr.mxu0 0.0
    %348 = vmatpush1.msra.mxu0 0.0
    %349 = vmatprep.subr.mxu0 0.0
    %350 = vmatpush1.msra.mxu0 0.0
    %351 = vmatprep.subr.mxu0 0.0
    %352 = vmatpush1.msra.mxu0 0.0
    %353 = vmatprep.subr.mxu0 0.0
    %354 = vmatpush1.msra.mxu0 0.0
    %355 = vmatprep.subr.mxu0 0.0
    %356 = vmatpush1.msra.mxu0 0.0
    %357 = vmatprep.subr.mxu0 0.0
    %358 = vmatpush1.msra.mxu0 %v331
    %359 = vmatprep.subr.mxu0 0.0
    %360 = vmatpush1.msra.mxu0 %v130
    %361 = vmatprep.subr.mxu0 0.0
    %362 = vmatpush1.msra.mxu0 %v129
    %363 = vmatprep.subr.mxu0 0.0
    %364 = vmatpush1.msra.mxu0 %v128
    %365 = vmatprep.subr.mxu0 0.0
    %366 = vmatpush2.msra.mxu0 0.0
    %367 = vmatprep.subr.mxu0 0.0
    %368 = vmatpush2.msra.mxu0 0.0
    %369 = vmatprep.subr.mxu0 0.0
    %370 = vmatpush2.msra.mxu0 0.0
    %371 = vmatprep.subr.mxu0 0.0
    %372 = vmatpush2.msra.mxu0 0.0
    %373 = vmatprep.subr.mxu0 0.0
    %374 = vmatpush2.msra.mxu0 0.0
    %375 = vmatprep.subr.mxu0 0.0
    %376 = vmatpush2.msra.mxu0 0.0
    %377 = vmatprep.subr.mxu0 0.0
    %378 = vmatpush2.msra.mxu0 0.0
    %379 = vmatprep.subr.mxu0 0.0
    %380 = vmatpush2.msra.mxu0 0.0
    %381 = vmatprep.subr.mxu0 0.0
    %382 = vmatpush2.msra.mxu0 0.0
    %383 = vmatprep.subr.mxu0 0.0
    %384 = vmatpush2.msra.mxu0 0.0
    %385 = vmatprep.subr.mxu0 0.0
    %386 = vmatpush2.msra.mxu0 0.0
    %387 = vmatprep.subr.mxu0 0.0
    %388 = vmatpush2.msra.mxu0 0.0
    %389 = vmatprep.subr.mxu0 0.0
    %390 = vmatpush2.msra.mxu0 0.0
    %391 = vmatprep.subr.mxu0 0.0
    %392 = vmatpush2.msra.mxu0 0.0
    %393 = vmatprep.subr.mxu0 0.0
    %394 = vmatpush2.msra.mxu0 0.0
    %395 = vmatprep.subr.mxu0 0.0
    %396 = vmatpush2.msra.mxu0 0.0
    %397 = vmatprep.mubr.f32.mxu0 0.0
    %398 = vmatmul.mubr.f32.gmra.mxu0 %v138
    %v399 = vpop.f32.mrf.mxu0
    %v400 = vadd.f32 %v135, %v399
    %v401 = vpop.f32.mrf.mxu0
    %402 = vmatprep.mubr.f32.mxu0 0.0
    %403 = vmatmul.mubr.f32.gmra.mxu0 %v141
    %v404 = vpop.f32.mrf.mxu0
    %v405 = vadd.f32 %v135, %v404
    %v406 = vpop.f32.mrf.mxu0
    %407 = vmatprep.mubr.f32.mxu0 0.0
    %408 = vmatmul.mubr.f32.gmra.mxu0 %v144
    %v409 = vpop.f32.mrf.mxu0
    %v410 = vadd.f32 %v135, %v409
    %v411 = vpop.f32.mrf.mxu0
    %412 = vmatprep.mubr.f32.mxu0 0.0
    %413 = vmatmul.mubr.f32.gmra.mxu0 %v147
    %v414 = vpop.f32.mrf.mxu0
    %v415 = vadd.f32 %v135, %v414
    %v416 = vpop.f32.mrf.mxu0
    %417 = vmatprep.mubr.f32.mxu0 0.0
    %418 = vmatmul.mubr.f32.gmra.mxu0 %v150
    %v419 = vpop.f32.mrf.mxu0
    %v420 = vadd.f32 %v135, %v419
    %v421 = vpop.f32.mrf.mxu0
    %422 = vmatprep.mubr.f32.mxu0 0.0
    %423 = vmatmul.mubr.f32.gmra.mxu0 %v153
    %v424 = vpop.f32.mrf.mxu0
    %v425 = vadd.f32 %v135, %v424
    %v426 = vpop.f32.mrf.mxu0
    %427 = vmatprep.mubr.f32.mxu0 0.0
    %428 = vmatmul.mubr.f32.gmra.mxu0 %v156
    %v429 = vpop.f32.mrf.mxu0
    %v430 = vadd.f32 %v135, %v429
    %v431 = vpop.f32.mrf.mxu0
    %432 = vmatprep.mubr.f32.mxu0 0.0
    %433 = vmatmul.mubr.f32.gmra.mxu0 %v159
    %v434 = vpop.f32.mrf.mxu0
    %v435 = vadd.f32 %v135, %v434
    %v436 = vpop.f32.mrf.mxu0
    %437 = vmatprep.mubr.f32.mxu0 0.0
    %438 = vmatmul.mubr.f32.gmra.mxu0 %v162
    %v439 = vpop.f32.mrf.mxu0
    %v440 = vadd.f32 %v135, %v439
    %v441 = vpop.f32.mrf.mxu0
    %442 = vmatprep.mubr.f32.mxu0 0.0
    %443 = vmatmul.mubr.f32.gmra.mxu0 %v165
    %v444 = vpop.f32.mrf.mxu0
    %v445 = vadd.f32 %v135, %v444
    %v446 = vpop.f32.mrf.mxu0
    %447 = vmatprep.mubr.f32.mxu0 0.0
    %448 = vmatmul.mubr.f32.gmra.mxu0 %v168
    %v449 = vpop.f32.mrf.mxu0
    %v450 = vadd.f32 %v135, %v449
    %v451 = vpop.f32.mrf.mxu0
    %452 = vmatprep.mubr.f32.mxu0 0.0
    %453 = vmatmul.mubr.f32.gmra.mxu0 %v171
    %v454 = vpop.f32.mrf.mxu0
    %v455 = vadd.f32 %v135, %v454
    %v456 = vpop.f32.mrf.mxu0
    %457 = vmatprep.mubr.f32.mxu0 0.0
    %458 = vmatmul.mubr.f32.gmra.mxu0 %v174
    %v459 = vpop.f32.mrf.mxu0
    %v460 = vadd.f32 %v135, %v459
    %v461 = vpop.f32.mrf.mxu0
    %462 = vmatprep.mubr.f32.mxu0 0.0
    %463 = vmatmul.mubr.f32.gmra.mxu0 %v177
    %v464 = vpop.f32.mrf.mxu0
    %v465 = vadd.f32 %v135, %v464
    %v466 = vpop.f32.mrf.mxu0
    %467 = vmatprep.mubr.f32.mxu0 0.0
    %468 = vmatmul.mubr.f32.gmra.mxu0 %v180
    %v469 = vpop.f32.mrf.mxu0
    %v470 = vadd.f32 %v135, %v469
    %v471 = vpop.f32.mrf.mxu0
    %472 = vmatprep.mubr.f32.mxu0 0.0
    %473 = vmatmul.mubr.f32.gmra.mxu0 %v183
    %v474 = vpop.f32.mrf.mxu0
    %v475 = vadd.f32 %v135, %v474
    %v476 = vpop.f32.mrf.mxu0
    %477 = vmatprep.mubr.f32.mxu0 0.0
    %478 = vmatmul.mubr.f32.gmra.mxu0 %v186
    %v479 = vpop.f32.mrf.mxu0
    %v480 = vadd.f32 %v135, %v479
    %v481 = vpop.f32.mrf.mxu0
    %482 = vmatprep.mubr.f32.mxu0 0.0
    %483 = vmatmul.mubr.f32.gmra.mxu0 %v189
    %v484 = vpop.f32.mrf.mxu0
    %v485 = vadd.f32 %v135, %v484
    %v486 = vpop.f32.mrf.mxu0
    %487 = vmatprep.mubr.f32.mxu0 0.0
    %488 = vmatmul.mubr.f32.gmra.mxu0 %v192
    %v489 = vpop.f32.mrf.mxu0
    %v490 = vadd.f32 %v135, %v489
    %v491 = vpop.f32.mrf.mxu0
    %492 = vmatprep.mubr.f32.mxu0 0.0
    %493 = vmatmul.mubr.f32.gmra.mxu0 %v195
    %v494 = vpop.f32.mrf.mxu0
    %v495 = vadd.f32 %v135, %v494
    %v496 = vpop.f32.mrf.mxu0
    %497 = vmatprep.mubr.f32.mxu0 0.0
    %498 = vmatmul.mubr.f32.gmra.mxu0 %v198
    %v499 = vpop.f32.mrf.mxu0
    %v500 = vadd.f32 %v135, %v499
    %v501 = vpop.f32.mrf.mxu0
    %502 = vmatprep.mubr.f32.mxu0 0.0
    %503 = vmatmul.mubr.f32.gmra.mxu0 %v201
    %v504 = vpop.f32.mrf.mxu0
    %v505 = vadd.f32 %v135, %v504
    %v506 = vpop.f32.mrf.mxu0
    %507 = vmatprep.mubr.f32.mxu0 0.0
    %508 = vmatmul.mubr.f32.gmra.mxu0 %v204
    %v509 = vpop.f32.mrf.mxu0
    %v510 = vadd.f32 %v135, %v509
    %v511 = vpop.f32.mrf.mxu0
    %512 = vmatprep.mubr.f32.mxu0 0.0
    %513 = vmatmul.mubr.f32.gmra.mxu0 %v207
    %v514 = vpop.f32.mrf.mxu0
    %v515 = vadd.f32 %v135, %v514
    %v516 = vpop.f32.mrf.mxu0
    %517 = vmatprep.mubr.f32.mxu0 0.0
    %518 = vmatmul.mubr.f32.gmra.mxu0 %v210
    %v519 = vpop.f32.mrf.mxu0
    %v520 = vadd.f32 %v135, %v519
    %v521 = vpop.f32.mrf.mxu0
    %522 = vmatprep.mubr.f32.mxu0 0.0
    %523 = vmatmul.mubr.f32.gmra.mxu0 %v213
    %v524 = vpop.f32.mrf.mxu0
    %v525 = vadd.f32 %v135, %v524
    %v526 = vpop.f32.mrf.mxu0
    %527 = vmatprep.mubr.f32.mxu0 0.0
    %528 = vmatmul.mubr.f32.gmra.mxu0 %v216
    %v529 = vpop.f32.mrf.mxu0
    %v530 = vadd.f32 %v135, %v529
    %v531 = vpop.f32.mrf.mxu0
    %532 = vmatprep.mubr.f32.mxu0 0.0
    %533 = vmatmul.mubr.f32.gmra.mxu0 %v219
    %v534 = vpop.f32.mrf.mxu0
    %v535 = vadd.f32 %v135, %v534
    %v536 = vpop.f32.mrf.mxu0
    %537 = vmatprep.mubr.f32.mxu0 0.0
    %538 = vmatmul.mubr.f32.gmra.mxu0 %v222
    %v539 = vpop.f32.mrf.mxu0
    %v540 = vadd.f32 %v135, %v539
    %v541 = vpop.f32.mrf.mxu0
    %542 = vmatprep.mubr.f32.mxu0 0.0
    %543 = vmatmul.mubr.f32.gmra.mxu0 %v225
    %v544 = vpop.f32.mrf.mxu0
    %v545 = vadd.f32 %v135, %v544
    %v546 = vpop.f32.mrf.mxu0
    %547 = vmatprep.mubr.f32.mxu0 0.0
    %548 = vmatmul.mubr.f32.gmra.mxu0 %v228
    %v549 = vpop.f32.mrf.mxu0
    %v550 = vadd.f32 %v135, %v549
    %v551 = vpop.f32.mrf.mxu0
    %552 = vmatprep.mubr.f32.mxu0 0.0
    %553 = vmatmul.mubr.f32.gmra.mxu0 %v231
    %v554 = vpop.f32.mrf.mxu0
    %v555 = vadd.f32 %v135, %v554
    %v556 = vpop.f32.mrf.mxu0
    %557 = vmatprep.mubr.f32.mxu0 0.0
    %558 = vmatmul.mubr.f32.gmra.mxu0 %v234
    %v559 = vpop.f32.mrf.mxu0
    %v560 = vadd.f32 %v135, %v559
    %v561 = vpop.f32.mrf.mxu0
    %562 = vmatprep.mubr.f32.mxu0 0.0
    %563 = vmatmul.mubr.f32.gmra.mxu0 %v237
    %v564 = vpop.f32.mrf.mxu0
    %v565 = vadd.f32 %v135, %v564
    %v566 = vpop.f32.mrf.mxu0
    %567 = vmatprep.mubr.f32.mxu0 0.0
    %568 = vmatmul.mubr.f32.gmra.mxu0 %v240
    %v569 = vpop.f32.mrf.mxu0
    %v570 = vadd.f32 %v135, %v569
    %v571 = vpop.f32.mrf.mxu0
    %572 = vmatprep.mubr.f32.mxu0 0.0
    %573 = vmatmul.mubr.f32.gmra.mxu0 %v243
    %v574 = vpop.f32.mrf.mxu0
    %v575 = vadd.f32 %v135, %v574
    %v576 = vpop.f32.mrf.mxu0
    %577 = vmatprep.mubr.f32.mxu0 0.0
    %578 = vmatmul.mubr.f32.gmra.mxu0 %v246
    %v579 = vpop.f32.mrf.mxu0
    %v580 = vadd.f32 %v135, %v579
    %v581 = vpop.f32.mrf.mxu0
    %582 = vmatprep.mubr.f32.mxu0 0.0
    %583 = vmatmul.mubr.f32.gmra.mxu0 %v249
    %v584 = vpop.f32.mrf.mxu0
    %v585 = vadd.f32 %v135, %v584
    %v586 = vpop.f32.mrf.mxu0
    %587 = vmatprep.mubr.f32.mxu0 0.0
    %588 = vmatmul.mubr.f32.gmra.mxu0 %v252
    %v589 = vpop.f32.mrf.mxu0
    %v590 = vadd.f32 %v135, %v589
    %v591 = vpop.f32.mrf.mxu0
    %592 = vmatprep.mubr.f32.mxu0 0.0
    %593 = vmatmul.mubr.f32.gmra.mxu0 %v255
    %v594 = vpop.f32.mrf.mxu0
    %v595 = vadd.f32 %v135, %v594
    %v596 = vpop.f32.mrf.mxu0
    %597 = vmatprep.mubr.f32.mxu0 0.0
    %598 = vmatmul.mubr.f32.gmra.mxu0 %v258
    %v599 = vpop.f32.mrf.mxu0
    %v600 = vadd.f32 %v135, %v599
    %v601 = vpop.f32.mrf.mxu0
    %602 = vmatprep.mubr.f32.mxu0 0.0
    %603 = vmatmul.mubr.f32.gmra.mxu0 %v261
    %v604 = vpop.f32.mrf.mxu0
    %v605 = vadd.f32 %v135, %v604
    %v606 = vpop.f32.mrf.mxu0
    %607 = vmatprep.mubr.f32.mxu0 0.0
    %608 = vmatmul.mubr.f32.gmra.mxu0 %v264
    %v609 = vpop.f32.mrf.mxu0
    %v610 = vadd.f32 %v135, %v609
    %v611 = vpop.f32.mrf.mxu0
    %612 = vmatprep.mubr.f32.mxu0 0.0
    %613 = vmatmul.mubr.f32.gmra.mxu0 %v267
    %v614 = vpop.f32.mrf.mxu0
    %v615 = vadd.f32 %v135, %v614
    %v616 = vpop.f32.mrf.mxu0
    %617 = vmatprep.mubr.f32.mxu0 0.0
    %618 = vmatmul.mubr.f32.gmra.mxu0 %v270
    %v619 = vpop.f32.mrf.mxu0
    %v620 = vadd.f32 %v135, %v619
    %v621 = vpop.f32.mrf.mxu0
    %622 = vmatprep.mubr.f32.mxu0 0.0
    %623 = vmatmul.mubr.f32.gmra.mxu0 %v273
    %v624 = vpop.f32.mrf.mxu0
    %v625 = vadd.f32 %v135, %v624
    %v626 = vpop.f32.mrf.mxu0
    %627 = vmatprep.mubr.f32.mxu0 0.0
    %628 = vmatmul.mubr.f32.gmra.mxu0 %v276
    %v629 = vpop.f32.mrf.mxu0
    %v630 = vadd.f32 %v135, %v629
    %v631 = vpop.f32.mrf.mxu0
    %632 = vmatprep.mubr.f32.mxu0 0.0
    %633 = vmatmul.mubr.f32.gmra.mxu0 %v279
    %v634 = vpop.f32.mrf.mxu0
    %v635 = vadd.f32 %v135, %v634
    %v636 = vpop.f32.mrf.mxu0
    %637 = vmatprep.mubr.f32.mxu0 0.0
    %638 = vmatmul.mubr.f32.gmra.mxu0 %v282
    %v639 = vpop.f32.mrf.mxu0
    %v640 = vadd.f32 %v135, %v639
    %v641 = vpop.f32.mrf.mxu0
    %642 = vmatprep.mubr.f32.mxu0 0.0
    %643 = vmatmul.mubr.f32.gmra.mxu0 %v285
    %v644 = vpop.f32.mrf.mxu0
    %v645 = vadd.f32 %v135, %v644
    %v646 = vpop.f32.mrf.mxu0
    %647 = vmatprep.mubr.f32.mxu0 0.0
    %648 = vmatmul.mubr.f32.gmra.mxu0 %v288
    %v649 = vpop.f32.mrf.mxu0
    %v650 = vadd.f32 %v135, %v649
    %v651 = vpop.f32.mrf.mxu0
    %652 = vmatprep.mubr.f32.mxu0 0.0
    %653 = vmatmul.mubr.f32.gmra.mxu0 %v291
    %v654 = vpop.f32.mrf.mxu0
    %v655 = vadd.f32 %v135, %v654
    %v656 = vpop.f32.mrf.mxu0
    %657 = vmatprep.mubr.f32.mxu0 0.0
    %658 = vmatmul.mubr.f32.gmra.mxu0 %v294
    %v659 = vpop.f32.mrf.mxu0
    %v660 = vadd.f32 %v135, %v659
    %v661 = vpop.f32.mrf.mxu0
    %662 = vmatprep.mubr.f32.mxu0 0.0
    %663 = vmatmul.mubr.f32.gmra.mxu0 %v297
    %v664 = vpop.f32.mrf.mxu0
    %v665 = vadd.f32 %v135, %v664
    %v666 = vpop.f32.mrf.mxu0
    %667 = vmatprep.mubr.f32.mxu0 0.0
    %668 = vmatmul.mubr.f32.gmra.mxu0 %v300
    %v669 = vpop.f32.mrf.mxu0
    %v670 = vadd.f32 %v135, %v669
    %v671 = vpop.f32.mrf.mxu0
    %672 = vmatprep.mubr.f32.mxu0 0.0
    %673 = vmatmul.mubr.f32.gmra.mxu0 %v303
    %v674 = vpop.f32.mrf.mxu0
    %v675 = vadd.f32 %v135, %v674
    %v676 = vpop.f32.mrf.mxu0
    %677 = vmatprep.mubr.f32.mxu0 0.0
    %678 = vmatmul.mubr.f32.gmra.mxu0 %v306
    %v679 = vpop.f32.mrf.mxu0
    %v680 = vadd.f32 %v135, %v679
    %v681 = vpop.f32.mrf.mxu0
    %682 = vmatprep.mubr.f32.mxu0 0.0
    %683 = vmatmul.mubr.f32.gmra.mxu0 %v309
    %v684 = vpop.f32.mrf.mxu0
    %v685 = vadd.f32 %v135, %v684
    %v686 = vpop.f32.mrf.mxu0
    %687 = vmatprep.mubr.f32.mxu0 0.0
    %688 = vmatmul.mubr.f32.gmra.mxu0 %v312
    %v689 = vpop.f32.mrf.mxu0
    %v690 = vadd.f32 %v135, %v689
    %v691 = vpop.f32.mrf.mxu0
    %692 = vmatprep.mubr.f32.mxu0 0.0
    %693 = vmatmul.mubr.f32.gmra.mxu0 %v315
    %v694 = vpop.f32.mrf.mxu0
    %v695 = vadd.f32 %v135, %v694
    %v696 = vpop.f32.mrf.mxu0
    %697 = vmatprep.mubr.f32.mxu0 0.0
    %698 = vmatmul.mubr.f32.gmra.mxu0 %v318
    %v699 = vpop.f32.mrf.mxu0
    %v700 = vadd.f32 %v135, %v699
    %v701 = vpop.f32.mrf.mxu0
    %702 = vmatprep.mubr.f32.mxu0 0.0
    %703 = vmatmul.mubr.f32.gmra.mxu0 %v321
    %v704 = vpop.f32.mrf.mxu0
    %v705 = vadd.f32 %v135, %v704
    %v706 = vpop.f32.mrf.mxu0
    %707 = vmatprep.mubr.f32.mxu0 0.0
    %708 = vmatmul.mubr.f32.gmra.mxu0 %v324
    %v709 = vpop.f32.mrf.mxu0
    %v710 = vadd.f32 %v135, %v709
    %v711 = vpop.f32.mrf.mxu0
    %712 = vmatprep.mubr.f32.mxu0 0.0
    %713 = vmatmul.mubr.f32.gmra.mxu0 %v327
    %v714 = vpop.f32.mrf.mxu0
    %v715 = vadd.f32 %v135, %v714
    %v716 = vpop.f32.mrf.mxu0
    %717 = vdwg.mxu0
    %v718 = vmax.f32 %v400, 0.0
    %v719 = vmax.f32 %v405, 0.0
    %v720 = vmax.f32 %v410, 0.0
    %v721 = vmax.f32 %v415, 0.0
    %v722 = vmax.f32 %v420, 0.0
    %v723 = vmax.f32 %v425, 0.0
    %v724 = vmax.f32 %v430, 0.0
    %v725 = vmax.f32 %v435, 0.0
    %v726 = vmax.f32 %v440, 0.0
    %v727 = vmax.f32 %v445, 0.0
    %v728 = vmax.f32 %v450, 0.0
    %v729 = vmax.f32 %v455, 0.0
    %v730 = vmax.f32 %v460, 0.0
    %v731 = vmax.f32 %v465, 0.0
    %v732 = vmax.f32 %v470, 0.0
    %v733 = vmax.f32 %v475, 0.0
    %v734 = vmax.f32 %v480, 0.0
    %v735 = vmax.f32 %v485, 0.0
    %v736 = vmax.f32 %v490, 0.0
    %v737 = vmax.f32 %v495, 0.0
    %v738 = vmax.f32 %v500, 0.0
    %v739 = vmax.f32 %v505, 0.0
    %v740 = vmax.f32 %v510, 0.0
    %v741 = vmax.f32 %v515, 0.0
    %v742 = vmax.f32 %v520, 0.0
    %v743 = vmax.f32 %v525, 0.0
    %v744 = vmax.f32 %v530, 0.0
    %v745 = vmax.f32 %v535, 0.0
    %v746 = vmax.f32 %v540, 0.0
    %v747 = vmax.f32 %v545, 0.0
    %v748 = vmax.f32 %v550, 0.0
    %v749 = vmax.f32 %v555, 0.0
    %v750 = vmax.f32 %v560, 0.0
    %v751 = vmax.f32 %v565, 0.0
    %v752 = vmax.f32 %v570, 0.0
    %v753 = vmax.f32 %v575, 0.0
    %v754 = vmax.f32 %v580, 0.0
    %v755 = vmax.f32 %v585, 0.0
    %v756 = vmax.f32 %v590, 0.0
    %v757 = vmax.f32 %v595, 0.0
    %v758 = vmax.f32 %v600, 0.0
    %v759 = vmax.f32 %v605, 0.0
    %v760 = vmax.f32 %v610, 0.0
    %v761 = vmax.f32 %v615, 0.0
    %v762 = vmax.f32 %v620, 0.0
    %v763 = vmax.f32 %v625, 0.0
    %v764 = vmax.f32 %v630, 0.0
    %v765 = vmax.f32 %v635, 0.0
    %v766 = vmax.f32 %v640, 0.0
    %v767 = vmax.f32 %v645, 0.0
    %v768 = vmax.f32 %v650, 0.0
    %v769 = vmax.f32 %v655, 0.0
    %v770 = vmax.f32 %v660, 0.0
    %v771 = vmax.f32 %v665, 0.0
    %v772 = vmax.f32 %v670, 0.0
    %v773 = vmax.f32 %v675, 0.0
    %v774 = vmax.f32 %v680, 0.0
    %v775 = vmax.f32 %v685, 0.0
    %v776 = vmax.f32 %v690, 0.0
    %v777 = vmax.f32 %v695, 0.0
    %v778 = vmax.f32 %v700, 0.0
    %v779 = vmax.f32 %v705, 0.0
    %v780 = vmax.f32 %v710, 0.0
    %v781 = vmax.f32 %v715, 0.0
    %vm782 = vcmask 261120
    %v783 = vsel %vm782, %v718, 0.0
    %v784 = vsel %vm782, %v719, 0.0
    %v785 = vadd.f32 %v783, %v784
    %v786 = vsel %vm782, %v720, 0.0
    %v787 = vadd.f32 %v785, %v786
    %v788 = vsel %vm782, %v721, 0.0
    %v789 = vadd.f32 %v787, %v788
    %v790 = vsel %vm782, %v722, 0.0
    %v791 = vadd.f32 %v789, %v790
    %v792 = vsel %vm782, %v723, 0.0
    %v793 = vadd.f32 %v791, %v792
    %v794 = vsel %vm782, %v724, 0.0
    %v795 = vadd.f32 %v793, %v794
    %v796 = vsel %vm782, %v725, 0.0
    %v797 = vadd.f32 %v795, %v796
    %v798 = vsel %vm782, %v726, 0.0
    %v799 = vadd.f32 %v797, %v798
    %v800 = vsel %vm782, %v727, 0.0
    %v801 = vadd.f32 %v799, %v800
    %v802 = vsel %vm782, %v728, 0.0
    %v803 = vadd.f32 %v801, %v802
    %v804 = vsel %vm782, %v729, 0.0
    %v805 = vadd.f32 %v803, %v804
    %v806 = vsel %vm782, %v730, 0.0
    %v807 = vadd.f32 %v805, %v806
    %v808 = vsel %vm782, %v731, 0.0
    %v809 = vadd.f32 %v807, %v808
    %v810 = vsel %vm782, %v732, 0.0
    %v811 = vadd.f32 %v809, %v810
    %v812 = vsel %vm782, %v733, 0.0
    %v813 = vadd.f32 %v811, %v812
    %v814 = vsel %vm782, %v734, 0.0
    %v815 = vadd.f32 %v813, %v814
    %v816 = vsel %vm782, %v735, 0.0
    %v817 = vadd.f32 %v815, %v816
    %v818 = vsel %vm782, %v736, 0.0
    %v819 = vadd.f32 %v817, %v818
    %v820 = vsel %vm782, %v737, 0.0
    %v821 = vadd.f32 %v819, %v820
    %v822 = vsel %vm782, %v738, 0.0
    %v823 = vadd.f32 %v821, %v822
    %v824 = vsel %vm782, %v739, 0.0
    %v825 = vadd.f32 %v823, %v824
    %v826 = vsel %vm782, %v740, 0.0
    %v827 = vadd.f32 %v825, %v826
    %v828 = vsel %vm782, %v741, 0.0
    %v829 = vadd.f32 %v827, %v828
    %v830 = vsel %vm782, %v742, 0.0
    %v831 = vadd.f32 %v829, %v830
    %v832 = vsel %vm782, %v743, 0.0
    %v833 = vadd.f32 %v831, %v832
    %v834 = vsel %vm782, %v744, 0.0
    %v835 = vadd.f32 %v833, %v834
    %v836 = vsel %vm782, %v745, 0.0
    %v837 = vadd.f32 %v835, %v836
    %v838 = vsel %vm782, %v746, 0.0
    %v839 = vadd.f32 %v837, %v838
    %v840 = vsel %vm782, %v747, 0.0
    %v841 = vadd.f32 %v839, %v840
    %v842 = vsel %vm782, %v748, 0.0
    %v843 = vadd.f32 %v841, %v842
    %v844 = vsel %vm782, %v749, 0.0
    %v845 = vadd.f32 %v843, %v844
    %v846 = vrot.slane %v845, 4
    %v847 = vadd.f32 %v845, %v846
    %v848 = vrot.slane %v847, 2
    %v849 = vadd.f32 %v847, %v848
    %v850 = vrot.slane %v849, 1
    %v851 = vadd.f32 %v849, %v850
    %v852 = vsel %vm782, %v750, 0.0
    %v853 = vsel %vm782, %v751, 0.0
    %v854 = vadd.f32 %v852, %v853
    %v855 = vsel %vm782, %v752, 0.0
    %v856 = vadd.f32 %v854, %v855
    %v857 = vsel %vm782, %v753, 0.0
    %v858 = vadd.f32 %v856, %v857
    %v859 = vsel %vm782, %v754, 0.0
    %v860 = vadd.f32 %v858, %v859
    %v861 = vsel %vm782, %v755, 0.0
    %v862 = vadd.f32 %v860, %v861
    %v863 = vsel %vm782, %v756, 0.0
    %v864 = vadd.f32 %v862, %v863
    %v865 = vsel %vm782, %v757, 0.0
    %v866 = vadd.f32 %v864, %v865
    %v867 = vsel %vm782, %v758, 0.0
    %v868 = vadd.f32 %v866, %v867
    %v869 = vsel %vm782, %v759, 0.0
    %v870 = vadd.f32 %v868, %v869
    %v871 = vsel %vm782, %v760, 0.0
    %v872 = vadd.f32 %v870, %v871
    %v873 = vsel %vm782, %v761, 0.0
    %v874 = vadd.f32 %v872, %v873
    %v875 = vsel %vm782, %v762, 0.0
    %v876 = vadd.f32 %v874, %v875
    %v877 = vsel %vm782, %v763, 0.0
    %v878 = vadd.f32 %v876, %v877
    %v879 = vsel %vm782, %v764, 0.0
    %v880 = vadd.f32 %v878, %v879
    %v881 = vsel %vm782, %v765, 0.0
    %v882 = vadd.f32 %v880, %v881
    %v883 = vsel %vm782, %v766, 0.0
    %v884 = vadd.f32 %v882, %v883
    %v885 = vsel %vm782, %v767, 0.0
    %v886 = vadd.f32 %v884, %v885
    %v887 = vsel %vm782, %v768, 0.0
    %v888 = vadd.f32 %v886, %v887
    %v889 = vsel %vm782, %v769, 0.0
    %v890 = vadd.f32 %v888, %v889
    %v891 = vsel %vm782, %v770, 0.0
    %v892 = vadd.f32 %v890, %v891
    %v893 = vsel %vm782, %v771, 0.0
    %v894 = vadd.f32 %v892, %v893
    %v895 = vsel %vm782, %v772, 0.0
    %v896 = vadd.f32 %v894, %v895
    %v897 = vsel %vm782, %v773, 0.0
    %v898 = vadd.f32 %v896, %v897
    %v899 = vsel %vm782, %v774, 0.0
    %v900 = vadd.f32 %v898, %v899
    %v901 = vsel %vm782, %v775, 0.0
    %v902 = vadd.f32 %v900, %v901
    %v903 = vsel %vm782, %v776, 0.0
    %v904 = vadd.f32 %v902, %v903
    %v905 = vsel %vm782, %v777, 0.0
    %v906 = vadd.f32 %v904, %v905
    %v907 = vsel %vm782, %v778, 0.0
    %v908 = vadd.f32 %v906, %v907
    %v909 = vsel %vm782, %v779, 0.0
    %v910 = vadd.f32 %v908, %v909
    %v911 = vsel %vm782, %v780, 0.0
    %v912 = vadd.f32 %v910, %v911
    %v913 = vsel %vm782, %v781, 0.0
    %v914 = vadd.f32 %v912, %v913
    %v915 = vrot.slane %v914, 4
    %v916 = vadd.f32 %v914, %v915
    %v917 = vrot.slane %v916, 2
    %v918 = vadd.f32 %v916, %v917
    %v919 = vrot.slane %v918, 1
    %v920 = vadd.f32 %v918, %v919
    %v921 = vrcp.pop 256.0
    %v922 = vmul.f32 %v851, %v921
    %v923 = vmul.f32 %v920, %v921
    %v924 = vlaneseq
    %v925 = vshrl.u32 %v924, 7
    %v926 = vsub.s32 1, %v925
    %v927 = vrot.slane %v18, %v926
    %vm930 = vcmask 1041409
    %v931 = vsel %vm930, %v923, %v922
    %v932 = vsel %vm782, %v931, 0
    %934 = vmatprep.subr.mxu0 0.0
    %935 = vmatpush1.msra.mxu0 0.0
    %936 = vmatprep.subr.mxu0 0.0
    %937 = vmatpush1.msra.mxu0 0.0
    %938 = vmatprep.subr.mxu0 0.0
    %939 = vmatpush1.msra.mxu0 0.0
    %940 = vmatprep.subr.mxu0 0.0
    %941 = vmatpush1.msra.mxu0 0.0
    %942 = vmatprep.subr.mxu0 0.0
    %943 = vmatpush1.msra.mxu0 0.0
    %944 = vmatprep.subr.mxu0 0.0
    %945 = vmatpush1.msra.mxu0 0.0
    %946 = vmatprep.subr.mxu0 0.0
    %947 = vmatpush1.msra.mxu0 0.0
    %948 = vmatprep.subr.mxu0 0.0
    %949 = vmatpush1.msra.mxu0 0.0
    %950 = vmatprep.subr.mxu0 0.0
    %951 = vmatpush1.msra.mxu0 0.0
    %952 = vmatprep.subr.mxu0 0.0
    %953 = vmatpush1.msra.mxu0 0.0
    %954 = vmatprep.subr.mxu0 0.0
    %955 = vmatpush1.msra.mxu0 0.0
    %956 = vmatprep.subr.mxu0 0.0
    %957 = vmatpush1.msra.mxu0 0.0
    %958 = vmatprep.subr.mxu0 0.0
    %959 = vmatpush1.msra.mxu0 %v23
    %960 = vmatprep.subr.mxu0 0.0
    %961 = vmatpush1.msra.mxu0 %v22
    %962 = vmatprep.subr.mxu0 0.0
    %963 = vmatpush1.msra.mxu0 %v21
    %964 = vmatprep.subr.mxu0 0.0
    %965 = vmatpush1.msra.mxu0 %v20
    %966 = vmatprep.subr.mxu0 0.0
    %967 = vmatpush2.msra.mxu0 0.0
    %968 = vmatprep.subr.mxu0 0.0
    %969 = vmatpush2.msra.mxu0 0.0
    %970 = vmatprep.subr.mxu0 0.0
    %971 = vmatpush2.msra.mxu0 0.0
    %972 = vmatprep.subr.mxu0 0.0
    %973 = vmatpush2.msra.mxu0 0.0
    %974 = vmatprep.subr.mxu0 0.0
    %975 = vmatpush2.msra.mxu0 0.0
    %976 = vmatprep.subr.mxu0 0.0
    %977 = vmatpush2.msra.mxu0 0.0
    %978 = vmatprep.subr.mxu0 0.0
    %979 = vmatpush2.msra.mxu0 0.0
    %980 = vmatprep.subr.mxu0 0.0
    %981 = vmatpush2.msra.mxu0 0.0
    %982 = vmatprep.subr.mxu0 0.0
    %983 = vmatpush2.msra.mxu0 0.0
    %984 = vmatprep.subr.mxu0 0.0
    %985 = vmatpush2.msra.mxu0 0.0
    %986 = vmatprep.subr.mxu0 0.0
    %987 = vmatpush2.msra.mxu0 0.0
    %988 = vmatprep.subr.mxu0 0.0
    %989 = vmatpush2.msra.mxu0 0.0
    %990 = vmatprep.subr.mxu0 0.0
    %991 = vmatpush2.msra.mxu0 0.0
    %992 = vmatprep.subr.mxu0 0.0
    %993 = vmatpush2.msra.mxu0 0.0
    %994 = vmatprep.subr.mxu0 0.0
    %995 = vmatpush2.msra.mxu0 0.0
    %996 = vmatprep.subr.mxu0 0.0
    %997 = vmatpush2.msra.mxu0 0.0
    %998 = vmatprep.mubr.f32.mxu0 0.0
    %999 = vmatmul.mubr.f32.gmra.mxu0 %v932
    %v1000 = vpop.f32.mrf.mxu0
    %v1001 = vadd.f32 %v927, %v1000
    %v1002 = vpop.f32.mrf.mxu0
    %1003 = vdwg.mxu0
    %vm1004 = vcmask 1041408
    %v1005 = vsel %vm1004, %v1001, 0.0
    %v1006 = vrot.slane %v1005, 4
    %v1007 = vadd.f32 %v1005, %v1006
    %v1008 = vrot.slane %v1007, 2
    %v1009 = vadd.f32 %v1007, %v1008
    %v1010 = vrot.slane %v1009, 1
    %v1011 = vadd.f32 %v1009, %v1010
    %v1012 = vrcp.pop 2.0
    %v1013 = vmul.f32 %v1011, %v1012
    %v1014 = vmul.f32 %v1001, %v1001
    %v1015 = vsel %vm1004, %v1014, 0.0
    %v1016 = vrot.slane %v1015, 4
    %v1017 = vadd.f32 %v1015, %v1016
    %v1018 = vrot.slane %v1017, 2
    %v1019 = vadd.f32 %v1017, %v1018
    %v1020 = vrot.slane %v1019, 1
    %v1021 = vadd.f32 %v1019, %v1020
    %v1022 = vmul.f32 %v1021, %v1012
    %v1023 = vmul.f32 %v1013, %v1013
    %v1024 = vsub.f32 %v1022, %v1023
    %v1025 = vsub.f32 %v1001, %v1013
    %v1026 = vadd.f32 %v1024, 1e-05
    %v1027 = vrsqrt.pop %v1026
    %v1028 = vmul.f32 %v1025, %v1027
    %v1029 = vlaneseq
    %v1030 = vshrl.u32 %v1029, 7
    %v1031 = vsub.s32 2, %v1030
    %v1032 = vrot.slane %v18, %v1031
    %v1033 = vmul.f32 %v1028, %v1032
    %v1034 = vlaneseq
    %v1035 = vshrl.u32 %v1034, 7
    %v1036 = vsub.s32 3, %v1035
    %v1037 = vrot.slane %v18, %v1036
    %v1038 = vadd.f32 %v1033, %v1037
    %v1039 = vmax.f32 %v1038, 0.0
    %v1040 = vlaneseq
    %v1041 = vshrl.u32 %v1040, 7
    %v1042 = vsub.s32 4, %v1041
    %v1043 = vrot.slane %v18, %v1042
    %1044 = vmatprep.subr.mxu0 0.0
    %1045 = vmatpush1.msra.mxu0 %v39
    %1046 = vmatprep.subr.mxu0 0.0
    %1047 = vmatpush1.msra.mxu0 %v38
    %1048 = vmatprep.subr.mxu0 0.0
    %1049 = vmatpush1.msra.mxu0 %v37
    %1050 = vmatprep.subr.mxu0 0.0
    %1051 = vmatpush1.msra.mxu0 %v36
    %1052 = vmatprep.subr.mxu0 0.0
    %1053 = vmatpush1.msra.mxu0 %v35
    %1054 = vmatprep.subr.mxu0 0.0
    %1055 = vmatpush1.msra.mxu0 %v34
    %1056 = vmatprep.subr.mxu0 0.0
    %1057 = vmatpush1.msra.mxu0 %v33
    %1058 = vmatprep.subr.mxu0 0.0
    %1059 = vmatpush1.msra.mxu0 %v32
    %1060 = vmatprep.subr.mxu0 0.0
    %1061 = vmatpush1.msra.mxu0 %v31
    %1062 = vmatprep.subr.mxu0 0.0
    %1063 = vmatpush1.msra.mxu0 %v30
    %1064 = vmatprep.subr.mxu0 0.0
    %1065 = vmatpush1.msra.mxu0 %v29
    %1066 = vmatprep.subr.mxu0 0.0
    %1067 = vmatpush1.msra.mxu0 %v28
    %1068 = vmatprep.subr.mxu0 0.0
    %1069 = vmatpush1.msra.mxu0 %v27
    %1070 = vmatprep.subr.mxu0 0.0
    %1071 = vmatpush1.msra.mxu0 %v26
    %1072 = vmatprep.subr.mxu0 0.0
    %1073 = vmatpush1.msra.mxu0 %v25
    %1074 = vmatprep.subr.mxu0 0.0
    %1075 = vmatpush1.msra.mxu0 %v24
    %1076 = vmatprep.subr.mxu0 0.0
    %1077 = vmatpush2.msra.mxu0 0.0
    %1078 = vmatprep.subr.mxu0 0.0
    %1079 = vmatpush2.msra.mxu0 0.0
    %1080 = vmatprep.subr.mxu0 0.0
    %1081 = vmatpush2.msra.mxu0 0.0
    %1082 = vmatprep.subr.mxu0 0.0
    %1083 = vmatpush2.msra.mxu0 0.0
    %1084 = vmatprep.subr.mxu0 0.0
    %1085 = vmatpush2.msra.mxu0 0.0
    %1086 = vmatprep.subr.mxu0 0.0
    %1087 = vmatpush2.msra.mxu0 0.0
    %1088 = vmatprep.subr.mxu0 0.0
    %1089 = vmatpush2.msra.mxu0 0.0
    %1090 = vmatprep.subr.mxu0 0.0
    %1091 = vmatpush2.msra.mxu0 0.0
    %1092 = vmatprep.subr.mxu0 0.0
    %1093 = vmatpush2.msra.mxu0 0.0
    %1094 = vmatprep.subr.mxu0 0.0
    %1095 = vmatpush2.msra.mxu0 0.0
    %1096 = vmatprep.subr.mxu0 0.0
    %1097 = vmatpush2.msra.mxu0 0.0
    %1098 = vmatprep.subr.mxu0 0.0
    %1099 = vmatpush2.msra.mxu0 0.0
    %1100 = vmatprep.subr.mxu0 0.0
    %1101 = vmatpush2.msra.mxu0 0.0
    %1102 = vmatprep.subr.mxu0 0.0
    %1103 = vmatpush2.msra.mxu0 0.0
    %1104 = vmatprep.subr.mxu0 0.0
    %1105 = vmatpush2.msra.mxu0 0.0
    %1106 = vmatprep.subr.mxu0 0.0
    %1107 = vmatpush2.msra.mxu0 0.0
    %1108 = vmatprep.mubr.f32.mxu0 0.0
    %1109 = vmatmul.mubr.f32.gmra.mxu0 %v1039
    %v1110 = vpop.f32.mrf.mxu0
    %v1111 = vadd.f32 %v1043, %v1110
    %v1112 = vpop.f32.mrf.mxu0
    %1113 = vdwg.mxu0
    %v1114 = vlaneseq
    %v1115 = vshrl.u32 %v1114, 7
    %v1116 = vsub.s32 5, %v1115
    %v1117 = vrot.slane %v18, %v1116
    %vm1118 = vcmask 523264
    %v1120 = vsel %vm1118, %v1111, 0
    %1122 = vmatprep.subr.mxu0 0.0
    %1123 = vmatpush1.msra.mxu0 0.0
    %1124 = vmatprep.subr.mxu0 0.0
    %1125 = vmatpush1.msra.mxu0 0.0
    %1126 = vmatprep.subr.mxu0 0.0
    %1127 = vmatpush1.msra.mxu0 0.0
    %1128 = vmatprep.subr.mxu0 0.0
    %1129 = vmatpush1.msra.mxu0 0.0
    %1130 = vmatprep.subr.mxu0 0.0
    %1131 = vmatpush1.msra.mxu0 0.0
    %1132 = vmatprep.subr.mxu0 0.0
    %1133 = vmatpush1.msra.mxu0 0.0
    %1134 = vmatprep.subr.mxu0 0.0
    %1135 = vmatpush1.msra.mxu0 0.0
    %1136 = vmatprep.subr.mxu0 0.0
    %1137 = vmatpush1.msra.mxu0 0.0
    %1138 = vmatprep.subr.mxu0 0.0
    %1139 = vmatpush1.msra.mxu0 %v47
    %1140 = vmatprep.subr.mxu0 0.0
    %1141 = vmatpush1.msra.mxu0 %v46
    %1142 = vmatprep.subr.mxu0 0.0
    %1143 = vmatpush1.msra.mxu0 %v45
    %1144 = vmatprep.subr.mxu0 0.0
    %1145 = vmatpush1.msra.mxu0 %v44
    %1146 = vmatprep.subr.mxu0 0.0
    %1147 = vmatpush1.msra.mxu0 %v43
    %1148 = vmatprep.subr.mxu0 0.0
    %1149 = vmatpush1.msra.mxu0 %v42
    %1150 = vmatprep.subr.mxu0 0.0
    %1151 = vmatpush1.msra.mxu0 %v41
    %1152 = vmatprep.subr.mxu0 0.0
    %1153 = vmatpush1.msra.mxu0 %v40
    %1154 = vmatprep.subr.mxu0 0.0
    %1155 = vmatpush2.msra.mxu0 0.0
    %1156 = vmatprep.subr.mxu0 0.0
    %1157 = vmatpush2.msra.mxu0 0.0
    %1158 = vmatprep.subr.mxu0 0.0
    %1159 = vmatpush2.msra.mxu0 0.0
    %1160 = vmatprep.subr.mxu0 0.0
    %1161 = vmatpush2.msra.mxu0 0.0
    %1162 = vmatprep.subr.mxu0 0.0
    %1163 = vmatpush2.msra.mxu0 0.0
    %1164 = vmatprep.subr.mxu0 0.0
    %1165 = vmatpush2.msra.mxu0 0.0
    %1166 = vmatprep.subr.mxu0 0.0
    %1167 = vmatpush2.msra.mxu0 0.0
    %1168 = vmatprep.subr.mxu0 0.0
    %1169 = vmatpush2.msra.mxu0 0.0
    %1170 = vmatprep.subr.mxu0 0.0
    %1171 = vmatpush2.msra.mxu0 0.0
    %1172 = vmatprep.subr.mxu0 0.0
    %1173 = vmatpush2.msra.mxu0 0.0
    %1174 = vmatprep.subr.mxu0 0.0
    %1175 = vmatpush2.msra.mxu0 0.0
    %1176 = vmatprep.subr.mxu0 0.0
    %1177 = vmatpush2.msra.mxu0 0.0
    %1178 = vmatprep.subr.mxu0 0.0
    %1179 = vmatpush2.msra.mxu0 0.0
    %1180 = vmatprep.subr.mxu0 0.0
    %1181 = vmatpush2.msra.mxu0 0.0
    %1182 = vmatprep.subr.mxu0 0.0
    %1183 = vmatpush2.msra.mxu0 0.0
    %1184 = vmatprep.subr.mxu0 0.0
    %1185 = vmatpush2.msra.mxu0 0.0
    %1186 = vmatprep.mubr.f32.mxu0 0.0
    %1187 = vmatmul.mubr.f32.gmra.mxu0 %v1120
    %v1188 = vpop.f32.mrf.mxu0
    %v1189 = vadd.f32 %v1117, %v1188
    %v1190 = vpop.f32.mrf.mxu0
    %1191 = vdwg.mxu0
    %v1192 = vsel %vm1004, %v1189, 0.0
    %v1193 = vrot.slane %v1192, 4
    %v1194 = vadd.f32 %v1192, %v1193
    %v1195 = vrot.slane %v1194, 2
    %v1196 = vadd.f32 %v1194, %v1195
    %v1197 = vrot.slane %v1196, 1
    %v1198 = vadd.f32 %v1196, %v1197
    %v1199 = vmul.f32 %v1198, %v1012
    %v1200 = vmul.f32 %v1189, %v1189
    %v1201 = vsel %vm1004, %v1200, 0.0
    %v1202 = vrot.slane %v1201, 4
    %v1203 = vadd.f32 %v1201, %v1202
    %v1204 = vrot.slane %v1203, 2
    %v1205 = vadd.f32 %v1203, %v1204
    %v1206 = vrot.slane %v1205, 1
    %v1207 = vadd.f32 %v1205, %v1206
    %v1208 = vmul.f32 %v1207, %v1012
    %v1209 = vmul.f32 %v1199, %v1199
    %v1210 = vsub.f32 %v1208, %v1209
    %v1211 = vsub.f32 %v1189, %v1199
    %v1212 = vadd.f32 %v1210, 1e-05
    %v1213 = vrsqrt.pop %v1212
    %v1214 = vmul.f32 %v1211, %v1213
    %v1215 = vlaneseq
    %v1216 = vshrl.u32 %v1215, 7
    %v1217 = vsub.s32 6, %v1216
    %v1218 = vrot.slane %v18, %v1217
    %v1219 = vmul.f32 %v1214, %v1218
    %v1220 = vlaneseq
    %v1221 = vshrl.u32 %v1220, 7
    %v1222 = vsub.s32 7, %v1221
    %v1223 = vrot.slane %v18, %v1222
    %v1224 = vadd.f32 %v1219, %v1223
    %v1225 = vmax.f32 %v1224, 0.0
    %v1226 = vlaneseq
    %v1227 = vshrl.u32 %v1226, 7
    %v1228 = vsub.s32 0, %v1227
    %v1229 = vrot.slane %v19, %v1228
    %1230 = vmatprep.subr.mxu0 0.0
    %1231 = vmatpush1.msra.mxu0 %v63
    %1232 = vmatprep.subr.mxu0 0.0
    %1233 = vmatpush1.msra.mxu0 %v62
    %1234 = vmatprep.subr.mxu0 0.0
    %1235 = vmatpush1.msra.mxu0 %v61
    %1236 = vmatprep.subr.mxu0 0.0
    %1237 = vmatpush1.msra.mxu0 %v60
    %1238 = vmatprep.subr.mxu0 0.0
    %1239 = vmatpush1.msra.mxu0 %v59
    %1240 = vmatprep.subr.mxu0 0.0
    %1241 = vmatpush1.msra.mxu0 %v58
    %1242 = vmatprep.subr.mxu0 0.0
    %1243 = vmatpush1.msra.mxu0 %v57
    %1244 = vmatprep.subr.mxu0 0.0
    %1245 = vmatpush1.msra.mxu0 %v56
    %1246 = vmatprep.subr.mxu0 0.0
    %1247 = vmatpush1.msra.mxu0 %v55
    %1248 = vmatprep.subr.mxu0 0.0
    %1249 = vmatpush1.msra.mxu0 %v54
    %1250 = vmatprep.subr.mxu0 0.0
    %1251 = vmatpush1.msra.mxu0 %v53
    %1252 = vmatprep.subr.mxu0 0.0
    %1253 = vmatpush1.msra.mxu0 %v52
    %1254 = vmatprep.subr.mxu0 0.0
    %1255 = vmatpush1.msra.mxu0 %v51
    %1256 = vmatprep.subr.mxu0 0.0
    %1257 = vmatpush1.msra.mxu0 %v50
    %1258 = vmatprep.subr.mxu0 0.0
    %1259 = vmatpush1.msra.mxu0 %v49
    %1260 = vmatprep.subr.mxu0 0.0
    %1261 = vmatpush1.msra.mxu0 %v48
    %1262 = vmatprep.subr.mxu0 0.0
    %1263 = vmatpush2.msra.mxu0 0.0
    %1264 = vmatprep.subr.mxu0 0.0
    %1265 = vmatpush2.msra.mxu0 0.0
    %1266 = vmatprep.subr.mxu0 0.0
    %1267 = vmatpush2.msra.mxu0 0.0
    %1268 = vmatprep.subr.mxu0 0.0
    %1269 = vmatpush2.msra.mxu0 0.0
    %1270 = vmatprep.subr.mxu0 0.0
    %1271 = vmatpush2.msra.mxu0 0.0
    %1272 = vmatprep.subr.mxu0 0.0
    %1273 = vmatpush2.msra.mxu0 0.0
    %1274 = vmatprep.subr.mxu0 0.0
    %1275 = vmatpush2.msra.mxu0 0.0
    %1276 = vmatprep.subr.mxu0 0.0
    %1277 = vmatpush2.msra.mxu0 0.0
    %1278 = vmatprep.subr.mxu0 0.0
    %1279 = vmatpush2.msra.mxu0 0.0
    %1280 = vmatprep.subr.mxu0 0.0
    %1281 = vmatpush2.msra.mxu0 0.0
    %1282 = vmatprep.subr.mxu0 0.0
    %1283 = vmatpush2.msra.mxu0 0.0
    %1284 = vmatprep.subr.mxu0 0.0
    %1285 = vmatpush2.msra.mxu0 0.0
    %1286 = vmatprep.subr.mxu0 0.0
    %1287 = vmatpush2.msra.mxu0 0.0
    %1288 = vmatprep.subr.mxu0 0.0
    %1289 = vmatpush2.msra.mxu0 0.0
    %1290 = vmatprep.subr.mxu0 0.0
    %1291 = vmatpush2.msra.mxu0 0.0
    %1292 = vmatprep.subr.mxu0 0.0
    %1293 = vmatpush2.msra.mxu0 0.0
    %1294 = vmatprep.mubr.f32.mxu0 0.0
    %1295 = vmatmul.mubr.f32.gmra.mxu0 %v1225
    %v1296 = vpop.f32.mrf.mxu0
    %v1297 = vadd.f32 %v1229, %v1296
    %v1298 = vpop.f32.mrf.mxu0
    %1299 = vdwg.mxu0
    %v1300 = vmul.f32 %v1297, %v1297
    %vm1301 = vcmask 254976
    %v1302 = vsel %vm1301, %v1300, 0.0
    %1303 = vadd.xlane.f32.xlu0 %v1302
    %v1304 = vpop.xlane.xlu0 %1303
    %v1305 = vmax.f32 %v1304, 1e-24
    %v1306 = vrsqrt.pop %v1305
    %v1307 = vmul.f32 %v1297, %v1306
    %v1308 = vmul.f32 %v1111, %v1111
    %1310 = vrot.lane.b32.xlu0 %v1308, 96
    %v1311 = vpop.permute.xlu0 %1310
    %v1313 = vsel %vm1301, %v1311, 0.0
    %1314 = vadd.xlane.f32.xlu0 %v1313
    %v1315 = vpop.xlane.xlu0 %1314
    %v1316 = vmax.f32 %v1315, 1e-24
    %v1317 = vrsqrt.pop %v1316
    %v1318 = vmul.f32 %v1111, %v1317
    %1320 = vrot.lane.b32.xlu0 %v1318, 96
    %v1321 = vpop.permute.xlu0 %1320
    %v1323 = vmul.f32 %v1307, %v1321
    %v1324 = vsel %vm1301, %v1323, 0.0
    %1325 = vadd.xlane.f32.xlu0 %v1324
    %v1326 = vpop.xlane.xlu0 %1325
    %v1327 = vmul.f32 %v1326, 2.0
    %v1328 = vsub.f32 2.0, %v1327
    %1330 = vrot.lane.b32.xlu0 %v1300, 96
    %v1331 = vpop.permute.xlu0 %1330
    %v1333 = vsel %vm1301, %v1331, 0.0
    %1334 = vadd.xlane.f32.xlu0 %v1333
    %v1335 = vpop.xlane.xlu0 %1334
    %v1336 = vmax.f32 %v1335, 1e-24
    %v1337 = vrsqrt.pop %v1336
    %v1338 = vmul.f32 %v1297, %v1337
    %v1339 = vsel %vm1301, %v1308, 0.0
    %1340 = vadd.xlane.f32.xlu0 %v1339
    %v1341 = vpop.xlane.xlu0 %1340
    %v1342 = vmax.f32 %v1341, 1e-24
    %v1343 = vrsqrt.pop %v1342
    %v1344 = vmul.f32 %v1111, %v1343
    %1346 = vrot.lane.b32.xlu0 %v1344, 32
    %v1347 = vpop.permute.xlu0 %1346
    %v1349 = vmul.f32 %v1338, %v1347
    %1351 = vrot.lane.b32.xlu0 %v1349, 96
    %v1352 = vpop.permute.xlu0 %1351
    %v1354 = vsel %vm1301, %v1352, 0.0
    %1355 = vadd.xlane.f32.xlu0 %v1354
    %v1356 = vpop.xlane.xlu0 %1355
    %v1357 = vmul.f32 %v1356, 2.0
    %v1358 = vsub.f32 2.0, %v1357
    %v1359 = vadd.f32 %v1328, %v1358
    %vm1360 = vcmask 1024
    %v1361 = vsel %vm1360, %v1359, 0.0
    %1362 = vadd.xlane.f32.xlu0 %v1361
    %v1363 = vpop.xlane.xlu0 %1362
    %v1364 = vrot.slane %v1363, 4
    %v1365 = vadd.f32 %v1363, %v1364
    %v1366 = vrot.slane %v1365, 2
    %v1367 = vadd.f32 %v1365, %v1366
    %v1368 = vrot.slane %v1367, 1
    %v1369 = vadd.f32 %v1367, %v1368
    %s1370 = vtos %v1369
    %v1371 = vrcp.pop 2.0
    %s1372 = vtos %v1371
    %s1373 = smul.f32 %s1370, %s1372
    %v1374 = vstv %s1373
    %vm1375 = vcmask 0
    %1376 = vst.msk [vmem:[#allocation2] sm:$0x1] %vm1375, %v1374
    // Predicated region
    $region18: #{byol_forward.1} parent=1 // pred_check
      _
    $region19: #{byol_forward.1} parent=1 // pred_check_branch
      %1378 = sbr.rel (0) target = $region21
    $region20: #{byol_forward.1} parent=1 // pred_region
      %s1380 = ssub.s32 16, 16
      %1381 = vsyncadd [#allocation3], %s1380
      %s1383 = sshll.u32 [#allocation2], 4
      %s1384 = int_to_ptr.vmem [resolvable:$true] %s1383
      %1386 = dma.vmem_to_hbm [thread:$0]  %s1384, 16, %s4, [#allocation3]
    $region21: #{byol_forward.1} parent=1 // pred_fallthru
      _
    // Predicated region
    $region22: #{byol_forward.1} parent=1 // pred_check
      _
    $region23: #{byol_forward.1} parent=1 // pred_check_branch
      %1388 = sbr.rel (0) target = $region25
    $region24: #{byol_forward.1} parent=1 // pred_region
      %1389 = dma.done [#allocation3], 16
    $region25: #{byol_forward.1} parent=1 // pred_fallthru
      _
    %1390 = vsyncpa [#allocation3], 1

</llo_original>
